<compile_context>
chip_gen: v6e
topology: v6e:2x2x1
jax: 0.10.0
libtpu: 0.0.40
codegen_flags: <defaults>
</compile_context>

<pallas_src>
import jax
import jax.numpy as jnp
from jax.experimental import pallas as pl
from jax.experimental.pallas import tpu as pltpu


def _th(v):
    # (tanh(v) + 1) / 2  -> values in [0, 1]; f32 EUP tanh on packed vregs.
    return (jnp.tanh(v) + 1.0) * 0.5


# ---------------------------------------------------------------------------
# Fused kernel: blend + pointwise conv (VPU) + ReLU + global pool + head (VPU)
# ---------------------------------------------------------------------------
def mixed_kernel(x_ref, mask_ref, pattern_ref, w1t_ref, b1_ref, w2t_ref,
                 b2_ref, out_ref):
    # Shapes (all VMEM, f32 compute):
    #   x_ref       (N*C, SUB, 128)  NCHW image packed so each (n,c) is one
    #                                (8,128)-aligned slab (free reshape)
    #   mask_ref    (SUB, 128)       packed, one vreg
    #   pattern_ref (SUB, 128)       packed, one vreg
    #   w1t_ref     (F, C)           conv weight, transposed
    #   b1_ref      (F, 1)
    #   w2t_ref     (NCLS, F)        head weight, transposed
    #   b2_ref      (NCLS, 1)
    #   out_ref     (F+NCLS, N)      fused output: rows [0,F) = latent^T,
    #                                rows [F,F+NCLS) = logits^T
    NC, SUB, LANES = x_ref.shape
    F, C = w1t_ref.shape
    NCLS = w2t_ref.shape[0]
    N = NC // C
    inv_hw = 1.0 / float(SUB * LANES)

    # ---- blend:  x = (1 - th(mask)) * x + th(mask) * th(pattern) -----------
    maskh = _th(mask_ref[...].astype(jnp.float32))          # (SUB, 128)
    patternh = _th(pattern_ref[...].astype(jnp.float32))    # (SUB, 128)
    blend_a = 1.0 - maskh                                    # (SUB, 128)
    blend_b = maskh * patternh                               # (SUB, 128)

    # One fully-packed (SUB,128) slab per (n, c) row; NC slabs total.
    xb = [blend_a * x_ref[r].astype(jnp.float32) + blend_b for r in range(NC)]

    # ---- hoisted weight / bias broadcasts (built once, reused everywhere) ---
    w1t = w1t_ref[...]                                       # (F, C)
    w1b = [jnp.broadcast_to(w1t[:, c:c + 1], (F, LANES)) for c in range(C)]
    b1b = jnp.broadcast_to(b1_ref[...], (F, LANES))          # (F, 128)

    # ---- pointwise conv (C contraction) on the VPU + ReLU + two-stage pool --
    # For each sample n and lane-group g (128 pixels):
    #   h_g = relu(sum_c w1[:,c] * xb[n,c,g,:] + b1)   -> (F, 128)
    # Pool stage 1: accumulate h_g over g with plain VPU adds (F,128).
    # Pool stage 2: one cross-lane (XLU) reduce per sample -> (F,1) column,
    # written directly into the fused output (no concatenate).
    for n in range(N):
        pool = jnp.zeros((F, LANES), jnp.float32)
        for g in range(SUB):
            acc = b1b
            for c in range(C):
                row = xb[n * C + c][g:g + 1, :]              # (1, 128)
                acc = acc + w1b[c] * row                     # (F, 128) FMA
            pool = pool + jnp.maximum(acc, 0.0)              # ReLU then pool
        lat_col = jnp.sum(pool, axis=1, keepdims=True) * inv_hw   # (F, 1)
        out_ref[0:F, n:n + 1] = lat_col.astype(out_ref.dtype)

    # ---- linear head on the VPU: logits^T = sum_f w2^T[:,f] * latent^T[f,:] -
    latent_t = out_ref[0:F, :].astype(jnp.float32)           # (F, N) readback
    w2t = w2t_ref[...]                                       # (NCLS, F)
    lacc = jnp.zeros((NCLS, N), jnp.float32)
    for f in range(F):
        lacc = lacc + w2t[:, f:f + 1] * latent_t[f:f + 1, :]
    out_ref[F:F + NCLS, :] = (lacc + b2_ref[...]).astype(out_ref.dtype)


# ---------------------------------------------------------------------------
# Mixed.forward wrapper
# ---------------------------------------------------------------------------
def mixed_forward_impl(x, params):
    N, C, H, W = x.shape
    HW = H * W
    LANES = 128
    assert HW % LANES == 0, "spatial size must pack into 128-lane groups"
    SUB = HW // LANES                                        # 8 for 32x32

    # Free (no-transpose) packed views / tiny weight relayouts.
    x3 = x.reshape(N * C, SUB, LANES).astype(jnp.float32)
    m3 = params['mask'].reshape(SUB, LANES).astype(jnp.float32)
    p3 = params['pattern'].reshape(SUB, LANES).astype(jnp.float32)
    w1t = jnp.transpose(params['w1']).astype(jnp.float32)    # (F, C)
    b1c = params['b1'].reshape(-1, 1).astype(jnp.float32)    # (F, 1)
    w2t = jnp.transpose(params['w2']).astype(jnp.float32)    # (NCLS, F)
    b2c = params['b2'].reshape(-1, 1).astype(jnp.float32)    # (NCLS, 1)
    F = w1t.shape[0]
    NCLS = w2t.shape[0]

    fused = pl.pallas_call(
        mixed_kernel,
        out_shape=jax.ShapeDtypeStruct((F + NCLS, N), jnp.float32),
        grid=(1,),
        in_specs=[
            pl.BlockSpec((N * C, SUB, LANES), lambda i: (0, 0, 0)),
            pl.BlockSpec((SUB, LANES), lambda i: (0, 0)),
            pl.BlockSpec((SUB, LANES), lambda i: (0, 0)),
            pl.BlockSpec((F, C), lambda i: (0, 0)),
            pl.BlockSpec((F, 1), lambda i: (0, 0)),
            pl.BlockSpec((NCLS, F), lambda i: (0, 0)),
            pl.BlockSpec((NCLS, 1), lambda i: (0, 0)),
        ],
        out_specs=pl.BlockSpec((F + NCLS, N), lambda i: (0, 0)),
        compiler_params=pltpu.CompilerParams(
            dimension_semantics=("arbitrary",)),
    )(x3, m3, p3, w1t, b1c, w2t, b2c)

    # Slice the fused slab apart and flip the tiny transposed results.
    latent = jnp.transpose(fused[0:F, :])                    # (N, F)
    logits = jnp.transpose(fused[F:F + NCLS, :])             # (N, NCLS)
    return logits, latent


mixed_forward = jax.jit(mixed_forward_impl)


# ---------------------------------------------------------------------------
# Pure-JAX reference (same stand-in backbone) for correctness checking
# ---------------------------------------------------------------------------
def reference_forward(x, params):
    maskh = (jnp.tanh(params['mask']) + 1.0) * 0.5            # (1, H, W)
    patternh = (jnp.tanh(params['pattern']) + 1.0) * 0.5
    xb = (1.0 - maskh) * x + maskh * patternh                 # (N, C, H, W)
    h = jnp.einsum('nchw,cf->nfhw', xb, params['w1'])
    h = jnp.maximum(h + params['b1'].reshape(1, -1, 1, 1), 0.0)
    latent = jnp.mean(h, axis=(2, 3))                         # (N, F)
    logits = latent @ params['w2'] + params['b2'].reshape(1, -1)
    return logits, latent


if __name__ == "__main__":
    key = jax.random.PRNGKey(0)
    k_pat, k_mask, k_x, k_w1, k_w2 = jax.random.split(key, 5)

    H = W = 32      # mask/pattern are fixed at 32x32 by the module
    N, C = 2, 3     # small batch, RGB-like channels
    F, NCLS = 16, 10

    params = {
        # Parameter(zeros + Normal(0, 10))  -> shape (1, 32, 32)
        'pattern': jax.random.normal(k_pat, (1, H, W), jnp.float32) * 10.0,
        # Parameter(zeros + Normal(-1, 0.5)) -> shape (1, 32, 32)
        'mask': jax.random.normal(k_mask, (1, H, W), jnp.float32) * 0.5 - 1.0,
        # resnet-stub weights
        'w1': jax.random.normal(k_w1, (C, F), jnp.float32) * 0.1,
        'b1': jnp.zeros((F,), jnp.float32),
        'w2': jax.random.normal(k_w2, (F, NCLS), jnp.float32) * 0.1,
        'b2': jnp.zeros((NCLS,), jnp.float32),
    }

    x = jax.random.normal(k_x, (N, C, H, W), jnp.float32)

    logits, latent = mixed_forward(x, params)
    jax.block_until_ready((logits, latent))

    assert logits.shape == (N, NCLS)
    assert latent.shape == (N, F)

    ref_logits, ref_latent = reference_forward(x, params)
    assert jnp.allclose(latent, ref_latent, rtol=1e-3, atol=1e-3)
    assert jnp.allclose(logits, ref_logits, rtol=1e-3, atol=1e-3)

    print("KERNEL_OK")
</pallas_src>

<mosaic_0001>
module attributes {stable_mosaic.version = 11 : i64} {
  func.func @mixed_kernel(%arg0: i32, %arg1: memref<6x8x128xf32, #tpu.memory_space<vmem>>, %arg2: memref<8x128xf32, #tpu.memory_space<vmem>>, %arg3: memref<8x128xf32, #tpu.memory_space<vmem>>, %arg4: memref<16x3xf32, #tpu.memory_space<vmem>>, %arg5: memref<16x1xf32, #tpu.memory_space<vmem>>, %arg6: memref<10x16xf32, #tpu.memory_space<vmem>>, %arg7: memref<10x1xf32, #tpu.memory_space<vmem>>, %arg8: memref<26x2xf32, #tpu.memory_space<vmem>>) attributes {dimension_semantics = [#tpu.dimension_semantics<arbitrary>], iteration_bounds = array<i64: 1>, scalar_prefetch = 0 : i64, scratch_operands = 0 : i64, tpu.core_type = #tpu.core_type<tc>, window_params = [{pipeline_mode = #tpu.pipeline_mode<synchronous>, transform_indices = @transform_0, window_bounds = array<i64: 6, 8, 128>}, {pipeline_mode = #tpu.pipeline_mode<synchronous>, transform_indices = @transform_1, window_bounds = array<i64: 8, 128>}, {pipeline_mode = #tpu.pipeline_mode<synchronous>, transform_indices = @transform_2, window_bounds = array<i64: 8, 128>}, {pipeline_mode = #tpu.pipeline_mode<synchronous>, transform_indices = @transform_3, window_bounds = array<i64: 16, 3>}, {pipeline_mode = #tpu.pipeline_mode<synchronous>, transform_indices = @transform_4, window_bounds = array<i64: 16, 1>}, {pipeline_mode = #tpu.pipeline_mode<synchronous>, transform_indices = @transform_5, window_bounds = array<i64: 10, 16>}, {pipeline_mode = #tpu.pipeline_mode<synchronous>, transform_indices = @transform_6, window_bounds = array<i64: 10, 1>}, {pipeline_mode = #tpu.pipeline_mode<synchronous>, transform_indices = @transform_7, window_bounds = array<i64: 26, 2>}]} {
    %c0 = arith.constant 0 : index
    %c0_0 = arith.constant 0 : index
    %0 = vector.load %arg2[%c0, %c0_0] : memref<8x128xf32, #tpu.memory_space<vmem>>, vector<8x128xf32>
    %1 = math.tanh %0 : vector<8x128xf32>
    %cst = arith.constant 1.000000e+00 : f32
    %2 = vector.broadcast %cst : f32 to vector<8x128xf32>
    %3 = arith.addf %1, %2 : vector<8x128xf32>
    %cst_1 = arith.constant 5.000000e-01 : f32
    %4 = vector.broadcast %cst_1 : f32 to vector<8x128xf32>
    %5 = arith.mulf %3, %4 : vector<8x128xf32>
    %c0_2 = arith.constant 0 : index
    %c0_3 = arith.constant 0 : index
    %6 = vector.load %arg3[%c0_2, %c0_3] : memref<8x128xf32, #tpu.memory_space<vmem>>, vector<8x128xf32>
    %7 = math.tanh %6 : vector<8x128xf32>
    %cst_4 = arith.constant 1.000000e+00 : f32
    %8 = vector.broadcast %cst_4 : f32 to vector<8x128xf32>
    %9 = arith.addf %7, %8 : vector<8x128xf32>
    %cst_5 = arith.constant 5.000000e-01 : f32
    %10 = vector.broadcast %cst_5 : f32 to vector<8x128xf32>
    %11 = arith.mulf %9, %10 : vector<8x128xf32>
    %cst_6 = arith.constant 1.000000e+00 : f32
    %12 = vector.broadcast %cst_6 : f32 to vector<8x128xf32>
    %13 = arith.subf %12, %5 : vector<8x128xf32>
    %14 = arith.mulf %5, %11 : vector<8x128xf32>
    %c0_7 = arith.constant 0 : index
    %c0_8 = arith.constant 0 : index
    %c0_9 = arith.constant 0 : index
    %15 = vector.load %arg1[%c0_7, %c0_8, %c0_9] : memref<6x8x128xf32, #tpu.memory_space<vmem>>, vector<1x8x128xf32>
    %16 = vector.shape_cast %15 : vector<1x8x128xf32> to vector<8x128xf32>
    %17 = arith.mulf %13, %16 : vector<8x128xf32>
    %18 = arith.addf %17, %14 : vector<8x128xf32>
    %c1 = arith.constant 1 : index
    %c0_10 = arith.constant 0 : index
    %c0_11 = arith.constant 0 : index
    %19 = vector.load %arg1[%c1, %c0_10, %c0_11] : memref<6x8x128xf32, #tpu.memory_space<vmem>>, vector<1x8x128xf32>
    %20 = vector.shape_cast %19 : vector<1x8x128xf32> to vector<8x128xf32>
    %21 = arith.mulf %13, %20 : vector<8x128xf32>
    %22 = arith.addf %21, %14 : vector<8x128xf32>
    %c2 = arith.constant 2 : index
    %c0_12 = arith.constant 0 : index
    %c0_13 = arith.constant 0 : index
    %23 = vector.load %arg1[%c2, %c0_12, %c0_13] : memref<6x8x128xf32, #tpu.memory_space<vmem>>, vector<1x8x128xf32>
    %24 = vector.shape_cast %23 : vector<1x8x128xf32> to vector<8x128xf32>
    %25 = arith.mulf %13, %24 : vector<8x128xf32>
    %26 = arith.addf %25, %14 : vector<8x128xf32>
    %c3 = arith.constant 3 : index
    %c0_14 = arith.constant 0 : index
    %c0_15 = arith.constant 0 : index
    %27 = vector.load %arg1[%c3, %c0_14, %c0_15] : memref<6x8x128xf32, #tpu.memory_space<vmem>>, vector<1x8x128xf32>
    %28 = vector.shape_cast %27 : vector<1x8x128xf32> to vector<8x128xf32>
    %29 = arith.mulf %13, %28 : vector<8x128xf32>
    %30 = arith.addf %29, %14 : vector<8x128xf32>
    %c4 = arith.constant 4 : index
    %c0_16 = arith.constant 0 : index
    %c0_17 = arith.constant 0 : index
    %31 = vector.load %arg1[%c4, %c0_16, %c0_17] : memref<6x8x128xf32, #tpu.memory_space<vmem>>, vector<1x8x128xf32>
    %32 = vector.shape_cast %31 : vector<1x8x128xf32> to vector<8x128xf32>
    %33 = arith.mulf %13, %32 : vector<8x128xf32>
    %34 = arith.addf %33, %14 : vector<8x128xf32>
    %c5 = arith.constant 5 : index
    %c0_18 = arith.constant 0 : index
    %c0_19 = arith.constant 0 : index
    %35 = vector.load %arg1[%c5, %c0_18, %c0_19] : memref<6x8x128xf32, #tpu.memory_space<vmem>>, vector<1x8x128xf32>
    %36 = vector.shape_cast %35 : vector<1x8x128xf32> to vector<8x128xf32>
    %37 = arith.mulf %13, %36 : vector<8x128xf32>
    %38 = arith.addf %37, %14 : vector<8x128xf32>
    %c0_20 = arith.constant 0 : index
    %c0_21 = arith.constant 0 : index
    %39 = vector.load %arg4[%c0_20, %c0_21] : memref<16x3xf32, #tpu.memory_space<vmem>>, vector<16x3xf32>
    %40 = vector.extract_strided_slice %39 {offsets = [0, 0], sizes = [16, 1], strides = [1, 1]} : vector<16x3xf32> to vector<16x1xf32>
    %41 = vector.shape_cast %40 : vector<16x1xf32> to vector<16x1xf32>
    %42 = vector.broadcast %41 : vector<16x1xf32> to vector<16x128xf32>
    %43 = vector.extract_strided_slice %39 {offsets = [0, 1], sizes = [16, 1], strides = [1, 1]} : vector<16x3xf32> to vector<16x1xf32>
    %44 = vector.shape_cast %43 : vector<16x1xf32> to vector<16x1xf32>
    %45 = vector.broadcast %44 : vector<16x1xf32> to vector<16x128xf32>
    %46 = vector.extract_strided_slice %39 {offsets = [0, 2], sizes = [16, 1], strides = [1, 1]} : vector<16x3xf32> to vector<16x1xf32>
    %47 = vector.shape_cast %46 : vector<16x1xf32> to vector<16x1xf32>
    %48 = vector.broadcast %47 : vector<16x1xf32> to vector<16x128xf32>
    %c0_22 = arith.constant 0 : index
    %c0_23 = arith.constant 0 : index
    %49 = vector.load %arg5[%c0_22, %c0_23] : memref<16x1xf32, #tpu.memory_space<vmem>>, vector<16x1xf32>
    %50 = vector.shape_cast %49 : vector<16x1xf32> to vector<16x1xf32>
    %51 = vector.broadcast %50 : vector<16x1xf32> to vector<16x128xf32>
    %cst_24 = arith.constant 0.000000e+00 : f32
    %52 = vector.broadcast %cst_24 : f32 to vector<16x128xf32>
    %53 = vector.extract_strided_slice %18 {offsets = [0, 0], sizes = [1, 128], strides = [1, 1]} : vector<8x128xf32> to vector<1x128xf32>
    %54 = vector.broadcast %53 : vector<1x128xf32> to vector<16x128xf32>
    %55 = arith.mulf %42, %54 : vector<16x128xf32>
    %56 = arith.addf %51, %55 : vector<16x128xf32>
    %57 = vector.extract_strided_slice %22 {offsets = [0, 0], sizes = [1, 128], strides = [1, 1]} : vector<8x128xf32> to vector<1x128xf32>
    %58 = vector.broadcast %57 : vector<1x128xf32> to vector<16x128xf32>
    %59 = arith.mulf %45, %58 : vector<16x128xf32>
    %60 = arith.addf %56, %59 : vector<16x128xf32>
    %61 = vector.extract_strided_slice %26 {offsets = [0, 0], sizes = [1, 128], strides = [1, 1]} : vector<8x128xf32> to vector<1x128xf32>
    %62 = vector.broadcast %61 : vector<1x128xf32> to vector<16x128xf32>
    %63 = arith.mulf %48, %62 : vector<16x128xf32>
    %64 = arith.addf %60, %63 : vector<16x128xf32>
    %cst_25 = arith.constant 0.000000e+00 : f32
    %65 = vector.broadcast %cst_25 : f32 to vector<16x128xf32>
    %66 = arith.maximumf %64, %65 : vector<16x128xf32>
    %67 = arith.addf %52, %66 : vector<16x128xf32>
    %68 = vector.extract_strided_slice %18 {offsets = [1, 0], sizes = [1, 128], strides = [1, 1]} : vector<8x128xf32> to vector<1x128xf32>
    %69 = vector.broadcast %68 : vector<1x128xf32> to vector<16x128xf32>
    %70 = arith.mulf %42, %69 : vector<16x128xf32>
    %71 = arith.addf %51, %70 : vector<16x128xf32>
    %72 = vector.extract_strided_slice %22 {offsets = [1, 0], sizes = [1, 128], strides = [1, 1]} : vector<8x128xf32> to vector<1x128xf32>
    %73 = vector.broadcast %72 : vector<1x128xf32> to vector<16x128xf32>
    %74 = arith.mulf %45, %73 : vector<16x128xf32>
    %75 = arith.addf %71, %74 : vector<16x128xf32>
    %76 = vector.extract_strided_slice %26 {offsets = [1, 0], sizes = [1, 128], strides = [1, 1]} : vector<8x128xf32> to vector<1x128xf32>
    %77 = vector.broadcast %76 : vector<1x128xf32> to vector<16x128xf32>
    %78 = arith.mulf %48, %77 : vector<16x128xf32>
    %79 = arith.addf %75, %78 : vector<16x128xf32>
    %cst_26 = arith.constant 0.000000e+00 : f32
    %80 = vector.broadcast %cst_26 : f32 to vector<16x128xf32>
    %81 = arith.maximumf %79, %80 : vector<16x128xf32>
    %82 = arith.addf %67, %81 : vector<16x128xf32>
    %83 = vector.extract_strided_slice %18 {offsets = [2, 0], sizes = [1, 128], strides = [1, 1]} : vector<8x128xf32> to vector<1x128xf32>
    %84 = vector.broadcast %83 : vector<1x128xf32> to vector<16x128xf32>
    %85 = arith.mulf %42, %84 : vector<16x128xf32>
    %86 = arith.addf %51, %85 : vector<16x128xf32>
    %87 = vector.extract_strided_slice %22 {offsets = [2, 0], sizes = [1, 128], strides = [1, 1]} : vector<8x128xf32> to vector<1x128xf32>
    %88 = vector.broadcast %87 : vector<1x128xf32> to vector<16x128xf32>
    %89 = arith.mulf %45, %88 : vector<16x128xf32>
    %90 = arith.addf %86, %89 : vector<16x128xf32>
    %91 = vector.extract_strided_slice %26 {offsets = [2, 0], sizes = [1, 128], strides = [1, 1]} : vector<8x128xf32> to vector<1x128xf32>
    %92 = vector.broadcast %91 : vector<1x128xf32> to vector<16x128xf32>
    %93 = arith.mulf %48, %92 : vector<16x128xf32>
    %94 = arith.addf %90, %93 : vector<16x128xf32>
    %cst_27 = arith.constant 0.000000e+00 : f32
    %95 = vector.broadcast %cst_27 : f32 to vector<16x128xf32>
    %96 = arith.maximumf %94, %95 : vector<16x128xf32>
    %97 = arith.addf %82, %96 : vector<16x128xf32>
    %98 = vector.extract_strided_slice %18 {offsets = [3, 0], sizes = [1, 128], strides = [1, 1]} : vector<8x128xf32> to vector<1x128xf32>
    %99 = vector.broadcast %98 : vector<1x128xf32> to vector<16x128xf32>
    %100 = arith.mulf %42, %99 : vector<16x128xf32>
    %101 = arith.addf %51, %100 : vector<16x128xf32>
    %102 = vector.extract_strided_slice %22 {offsets = [3, 0], sizes = [1, 128], strides = [1, 1]} : vector<8x128xf32> to vector<1x128xf32>
    %103 = vector.broadcast %102 : vector<1x128xf32> to vector<16x128xf32>
    %104 = arith.mulf %45, %103 : vector<16x128xf32>
    %105 = arith.addf %101, %104 : vector<16x128xf32>
    %106 = vector.extract_strided_slice %26 {offsets = [3, 0], sizes = [1, 128], strides = [1, 1]} : vector<8x128xf32> to vector<1x128xf32>
    %107 = vector.broadcast %106 : vector<1x128xf32> to vector<16x128xf32>
    %108 = arith.mulf %48, %107 : vector<16x128xf32>
    %109 = arith.addf %105, %108 : vector<16x128xf32>
    %cst_28 = arith.constant 0.000000e+00 : f32
    %110 = vector.broadcast %cst_28 : f32 to vector<16x128xf32>
    %111 = arith.maximumf %109, %110 : vector<16x128xf32>
    %112 = arith.addf %97, %111 : vector<16x128xf32>
    %113 = vector.extract_strided_slice %18 {offsets = [4, 0], sizes = [1, 128], strides = [1, 1]} : vector<8x128xf32> to vector<1x128xf32>
    %114 = vector.broadcast %113 : vector<1x128xf32> to vector<16x128xf32>
    %115 = arith.mulf %42, %114 : vector<16x128xf32>
    %116 = arith.addf %51, %115 : vector<16x128xf32>
    %117 = vector.extract_strided_slice %22 {offsets = [4, 0], sizes = [1, 128], strides = [1, 1]} : vector<8x128xf32> to vector<1x128xf32>
    %118 = vector.broadcast %117 : vector<1x128xf32> to vector<16x128xf32>
    %119 = arith.mulf %45, %118 : vector<16x128xf32>
    %120 = arith.addf %116, %119 : vector<16x128xf32>
    %121 = vector.extract_strided_slice %26 {offsets = [4, 0], sizes = [1, 128], strides = [1, 1]} : vector<8x128xf32> to vector<1x128xf32>
    %122 = vector.broadcast %121 : vector<1x128xf32> to vector<16x128xf32>
    %123 = arith.mulf %48, %122 : vector<16x128xf32>
    %124 = arith.addf %120, %123 : vector<16x128xf32>
    %cst_29 = arith.constant 0.000000e+00 : f32
    %125 = vector.broadcast %cst_29 : f32 to vector<16x128xf32>
    %126 = arith.maximumf %124, %125 : vector<16x128xf32>
    %127 = arith.addf %112, %126 : vector<16x128xf32>
    %128 = vector.extract_strided_slice %18 {offsets = [5, 0], sizes = [1, 128], strides = [1, 1]} : vector<8x128xf32> to vector<1x128xf32>
    %129 = vector.broadcast %128 : vector<1x128xf32> to vector<16x128xf32>
    %130 = arith.mulf %42, %129 : vector<16x128xf32>
    %131 = arith.addf %51, %130 : vector<16x128xf32>
    %132 = vector.extract_strided_slice %22 {offsets = [5, 0], sizes = [1, 128], strides = [1, 1]} : vector<8x128xf32> to vector<1x128xf32>
    %133 = vector.broadcast %132 : vector<1x128xf32> to vector<16x128xf32>
    %134 = arith.mulf %45, %133 : vector<16x128xf32>
    %135 = arith.addf %131, %134 : vector<16x128xf32>
    %136 = vector.extract_strided_slice %26 {offsets = [5, 0], sizes = [1, 128], strides = [1, 1]} : vector<8x128xf32> to vector<1x128xf32>
    %137 = vector.broadcast %136 : vector<1x128xf32> to vector<16x128xf32>
    %138 = arith.mulf %48, %137 : vector<16x128xf32>
    %139 = arith.addf %135, %138 : vector<16x128xf32>
    %cst_30 = arith.constant 0.000000e+00 : f32
    %140 = vector.broadcast %cst_30 : f32 to vector<16x128xf32>
    %141 = arith.maximumf %139, %140 : vector<16x128xf32>
    %142 = arith.addf %127, %141 : vector<16x128xf32>
    %143 = vector.extract_strided_slice %18 {offsets = [6, 0], sizes = [1, 128], strides = [1, 1]} : vector<8x128xf32> to vector<1x128xf32>
    %144 = vector.broadcast %143 : vector<1x128xf32> to vector<16x128xf32>
    %145 = arith.mulf %42, %144 : vector<16x128xf32>
    %146 = arith.addf %51, %145 : vector<16x128xf32>
    %147 = vector.extract_strided_slice %22 {offsets = [6, 0], sizes = [1, 128], strides = [1, 1]} : vector<8x128xf32> to vector<1x128xf32>
    %148 = vector.broadcast %147 : vector<1x128xf32> to vector<16x128xf32>
    %149 = arith.mulf %45, %148 : vector<16x128xf32>
    %150 = arith.addf %146, %149 : vector<16x128xf32>
    %151 = vector.extract_strided_slice %26 {offsets = [6, 0], sizes = [1, 128], strides = [1, 1]} : vector<8x128xf32> to vector<1x128xf32>
    %152 = vector.broadcast %151 : vector<1x128xf32> to vector<16x128xf32>
    %153 = arith.mulf %48, %152 : vector<16x128xf32>
    %154 = arith.addf %150, %153 : vector<16x128xf32>
    %cst_31 = arith.constant 0.000000e+00 : f32
    %155 = vector.broadcast %cst_31 : f32 to vector<16x128xf32>
    %156 = arith.maximumf %154, %155 : vector<16x128xf32>
    %157 = arith.addf %142, %156 : vector<16x128xf32>
    %158 = vector.extract_strided_slice %18 {offsets = [7, 0], sizes = [1, 128], strides = [1, 1]} : vector<8x128xf32> to vector<1x128xf32>
    %159 = vector.broadcast %158 : vector<1x128xf32> to vector<16x128xf32>
    %160 = arith.mulf %42, %159 : vector<16x128xf32>
    %161 = arith.addf %51, %160 : vector<16x128xf32>
    %162 = vector.extract_strided_slice %22 {offsets = [7, 0], sizes = [1, 128], strides = [1, 1]} : vector<8x128xf32> to vector<1x128xf32>
    %163 = vector.broadcast %162 : vector<1x128xf32> to vector<16x128xf32>
    %164 = arith.mulf %45, %163 : vector<16x128xf32>
    %165 = arith.addf %161, %164 : vector<16x128xf32>
    %166 = vector.extract_strided_slice %26 {offsets = [7, 0], sizes = [1, 128], strides = [1, 1]} : vector<8x128xf32> to vector<1x128xf32>
    %167 = vector.broadcast %166 : vector<1x128xf32> to vector<16x128xf32>
    %168 = arith.mulf %48, %167 : vector<16x128xf32>
    %169 = arith.addf %165, %168 : vector<16x128xf32>
    %cst_32 = arith.constant 0.000000e+00 : f32
    %170 = vector.broadcast %cst_32 : f32 to vector<16x128xf32>
    %171 = arith.maximumf %169, %170 : vector<16x128xf32>
    %172 = arith.addf %157, %171 : vector<16x128xf32>
    %cst_33 = arith.constant dense<0.000000e+00> : vector<16xf32>
    %173 = vector.multi_reduction <add>, %172, %cst_33 [1] : vector<16x128xf32> to vector<16xf32>
    %174 = vector.shape_cast %173 : vector<16xf32> to vector<16x1xf32>
    %cst_34 = arith.constant 9.765625E-4 : f32
    %175 = vector.broadcast %cst_34 : f32 to vector<16x1xf32>
    %176 = arith.mulf %174, %175 : vector<16x1xf32>
    %c0_35 = arith.constant 0 : index
    %c0_36 = arith.constant 0 : index
    %177 = vector.load %arg8[%c0_35, %c0_36] : memref<26x2xf32, #tpu.memory_space<vmem>>, vector<16x1xf32>
    tpu.vector_store %arg8[%c0_35, %c0_36], %176 {strides = array<i32>} : memref<26x2xf32, #tpu.memory_space<vmem>>, vector<16x1xf32>,
    %cst_37 = arith.constant 0.000000e+00 : f32
    %178 = vector.broadcast %cst_37 : f32 to vector<16x128xf32>
    %179 = vector.extract_strided_slice %30 {offsets = [0, 0], sizes = [1, 128], strides = [1, 1]} : vector<8x128xf32> to vector<1x128xf32>
    %180 = vector.broadcast %179 : vector<1x128xf32> to vector<16x128xf32>
    %181 = arith.mulf %42, %180 : vector<16x128xf32>
    %182 = arith.addf %51, %181 : vector<16x128xf32>
    %183 = vector.extract_strided_slice %34 {offsets = [0, 0], sizes = [1, 128], strides = [1, 1]} : vector<8x128xf32> to vector<1x128xf32>
    %184 = vector.broadcast %183 : vector<1x128xf32> to vector<16x128xf32>
    %185 = arith.mulf %45, %184 : vector<16x128xf32>
    %186 = arith.addf %182, %185 : vector<16x128xf32>
    %187 = vector.extract_strided_slice %38 {offsets = [0, 0], sizes = [1, 128], strides = [1, 1]} : vector<8x128xf32> to vector<1x128xf32>
    %188 = vector.broadcast %187 : vector<1x128xf32> to vector<16x128xf32>
    %189 = arith.mulf %48, %188 : vector<16x128xf32>
    %190 = arith.addf %186, %189 : vector<16x128xf32>
    %cst_38 = arith.constant 0.000000e+00 : f32
    %191 = vector.broadcast %cst_38 : f32 to vector<16x128xf32>
    %192 = arith.maximumf %190, %191 : vector<16x128xf32>
    %193 = arith.addf %178, %192 : vector<16x128xf32>
    %194 = vector.extract_strided_slice %30 {offsets = [1, 0], sizes = [1, 128], strides = [1, 1]} : vector<8x128xf32> to vector<1x128xf32>
    %195 = vector.broadcast %194 : vector<1x128xf32> to vector<16x128xf32>
    %196 = arith.mulf %42, %195 : vector<16x128xf32>
    %197 = arith.addf %51, %196 : vector<16x128xf32>
    %198 = vector.extract_strided_slice %34 {offsets = [1, 0], sizes = [1, 128], strides = [1, 1]} : vector<8x128xf32> to vector<1x128xf32>
    %199 = vector.broadcast %198 : vector<1x128xf32> to vector<16x128xf32>
    %200 = arith.mulf %45, %199 : vector<16x128xf32>
    %201 = arith.addf %197, %200 : vector<16x128xf32>
    %202 = vector.extract_strided_slice %38 {offsets = [1, 0], sizes = [1, 128], strides = [1, 1]} : vector<8x128xf32> to vector<1x128xf32>
    %203 = vector.broadcast %202 : vector<1x128xf32> to vector<16x128xf32>
    %204 = arith.mulf %48, %203 : vector<16x128xf32>
    %205 = arith.addf %201, %204 : vector<16x128xf32>
    %cst_39 = arith.constant 0.000000e+00 : f32
    %206 = vector.broadcast %cst_39 : f32 to vector<16x128xf32>
    %207 = arith.maximumf %205, %206 : vector<16x128xf32>
    %208 = arith.addf %193, %207 : vector<16x128xf32>
    %209 = vector.extract_strided_slice %30 {offsets = [2, 0], sizes = [1, 128], strides = [1, 1]} : vector<8x128xf32> to vector<1x128xf32>
    %210 = vector.broadcast %209 : vector<1x128xf32> to vector<16x128xf32>
    %211 = arith.mulf %42, %210 : vector<16x128xf32>
    %212 = arith.addf %51, %211 : vector<16x128xf32>
    %213 = vector.extract_strided_slice %34 {offsets = [2, 0], sizes = [1, 128], strides = [1, 1]} : vector<8x128xf32> to vector<1x128xf32>
    %214 = vector.broadcast %213 : vector<1x128xf32> to vector<16x128xf32>
    %215 = arith.mulf %45, %214 : vector<16x128xf32>
    %216 = arith.addf %212, %215 : vector<16x128xf32>
    %217 = vector.extract_strided_slice %38 {offsets = [2, 0], sizes = [1, 128], strides = [1, 1]} : vector<8x128xf32> to vector<1x128xf32>
    %218 = vector.broadcast %217 : vector<1x128xf32> to vector<16x128xf32>
    %219 = arith.mulf %48, %218 : vector<16x128xf32>
    %220 = arith.addf %216, %219 : vector<16x128xf32>
    %cst_40 = arith.constant 0.000000e+00 : f32
    %221 = vector.broadcast %cst_40 : f32 to vector<16x128xf32>
    %222 = arith.maximumf %220, %221 : vector<16x128xf32>
    %223 = arith.addf %208, %222 : vector<16x128xf32>
    %224 = vector.extract_strided_slice %30 {offsets = [3, 0], sizes = [1, 128], strides = [1, 1]} : vector<8x128xf32> to vector<1x128xf32>
    %225 = vector.broadcast %224 : vector<1x128xf32> to vector<16x128xf32>
    %226 = arith.mulf %42, %225 : vector<16x128xf32>
    %227 = arith.addf %51, %226 : vector<16x128xf32>
    %228 = vector.extract_strided_slice %34 {offsets = [3, 0], sizes = [1, 128], strides = [1, 1]} : vector<8x128xf32> to vector<1x128xf32>
    %229 = vector.broadcast %228 : vector<1x128xf32> to vector<16x128xf32>
    %230 = arith.mulf %45, %229 : vector<16x128xf32>
    %231 = arith.addf %227, %230 : vector<16x128xf32>
    %232 = vector.extract_strided_slice %38 {offsets = [3, 0], sizes = [1, 128], strides = [1, 1]} : vector<8x128xf32> to vector<1x128xf32>
    %233 = vector.broadcast %232 : vector<1x128xf32> to vector<16x128xf32>
    %234 = arith.mulf %48, %233 : vector<16x128xf32>
    %235 = arith.addf %231, %234 : vector<16x128xf32>
    %cst_41 = arith.constant 0.000000e+00 : f32
    %236 = vector.broadcast %cst_41 : f32 to vector<16x128xf32>
    %237 = arith.maximumf %235, %236 : vector<16x128xf32>
    %238 = arith.addf %223, %237 : vector<16x128xf32>
    %239 = vector.extract_strided_slice %30 {offsets = [4, 0], sizes = [1, 128], strides = [1, 1]} : vector<8x128xf32> to vector<1x128xf32>
    %240 = vector.broadcast %239 : vector<1x128xf32> to vector<16x128xf32>
    %241 = arith.mulf %42, %240 : vector<16x128xf32>
    %242 = arith.addf %51, %241 : vector<16x128xf32>
    %243 = vector.extract_strided_slice %34 {offsets = [4, 0], sizes = [1, 128], strides = [1, 1]} : vector<8x128xf32> to vector<1x128xf32>
    %244 = vector.broadcast %243 : vector<1x128xf32> to vector<16x128xf32>
    %245 = arith.mulf %45, %244 : vector<16x128xf32>
    %246 = arith.addf %242, %245 : vector<16x128xf32>
    %247 = vector.extract_strided_slice %38 {offsets = [4, 0], sizes = [1, 128], strides = [1, 1]} : vector<8x128xf32> to vector<1x128xf32>
    %248 = vector.broadcast %247 : vector<1x128xf32> to vector<16x128xf32>
    %249 = arith.mulf %48, %248 : vector<16x128xf32>
    %250 = arith.addf %246, %249 : vector<16x128xf32>
    %cst_42 = arith.constant 0.000000e+00 : f32
    %251 = vector.broadcast %cst_42 : f32 to vector<16x128xf32>
    %252 = arith.maximumf %250, %251 : vector<16x128xf32>
    %253 = arith.addf %238, %252 : vector<16x128xf32>
    %254 = vector.extract_strided_slice %30 {offsets = [5, 0], sizes = [1, 128], strides = [1, 1]} : vector<8x128xf32> to vector<1x128xf32>
    %255 = vector.broadcast %254 : vector<1x128xf32> to vector<16x128xf32>
    %256 = arith.mulf %42, %255 : vector<16x128xf32>
    %257 = arith.addf %51, %256 : vector<16x128xf32>
    %258 = vector.extract_strided_slice %34 {offsets = [5, 0], sizes = [1, 128], strides = [1, 1]} : vector<8x128xf32> to vector<1x128xf32>
    %259 = vector.broadcast %258 : vector<1x128xf32> to vector<16x128xf32>
    %260 = arith.mulf %45, %259 : vector<16x128xf32>
    %261 = arith.addf %257, %260 : vector<16x128xf32>
    %262 = vector.extract_strided_slice %38 {offsets = [5, 0], sizes = [1, 128], strides = [1, 1]} : vector<8x128xf32> to vector<1x128xf32>
    %263 = vector.broadcast %262 : vector<1x128xf32> to vector<16x128xf32>
    %264 = arith.mulf %48, %263 : vector<16x128xf32>
    %265 = arith.addf %261, %264 : vector<16x128xf32>
    %cst_43 = arith.constant 0.000000e+00 : f32
    %266 = vector.broadcast %cst_43 : f32 to vector<16x128xf32>
    %267 = arith.maximumf %265, %266 : vector<16x128xf32>
    %268 = arith.addf %253, %267 : vector<16x128xf32>
    %269 = vector.extract_strided_slice %30 {offsets = [6, 0], sizes = [1, 128], strides = [1, 1]} : vector<8x128xf32> to vector<1x128xf32>
    %270 = vector.broadcast %269 : vector<1x128xf32> to vector<16x128xf32>
    %271 = arith.mulf %42, %270 : vector<16x128xf32>
    %272 = arith.addf %51, %271 : vector<16x128xf32>
    %273 = vector.extract_strided_slice %34 {offsets = [6, 0], sizes = [1, 128], strides = [1, 1]} : vector<8x128xf32> to vector<1x128xf32>
    %274 = vector.broadcast %273 : vector<1x128xf32> to vector<16x128xf32>
    %275 = arith.mulf %45, %274 : vector<16x128xf32>
    %276 = arith.addf %272, %275 : vector<16x128xf32>
    %277 = vector.extract_strided_slice %38 {offsets = [6, 0], sizes = [1, 128], strides = [1, 1]} : vector<8x128xf32> to vector<1x128xf32>
    %278 = vector.broadcast %277 : vector<1x128xf32> to vector<16x128xf32>
    %279 = arith.mulf %48, %278 : vector<16x128xf32>
    %280 = arith.addf %276, %279 : vector<16x128xf32>
    %cst_44 = arith.constant 0.000000e+00 : f32
    %281 = vector.broadcast %cst_44 : f32 to vector<16x128xf32>
    %282 = arith.maximumf %280, %281 : vector<16x128xf32>
    %283 = arith.addf %268, %282 : vector<16x128xf32>
    %284 = vector.extract_strided_slice %30 {offsets = [7, 0], sizes = [1, 128], strides = [1, 1]} : vector<8x128xf32> to vector<1x128xf32>
    %285 = vector.broadcast %284 : vector<1x128xf32> to vector<16x128xf32>
    %286 = arith.mulf %42, %285 : vector<16x128xf32>
    %287 = arith.addf %51, %286 : vector<16x128xf32>
    %288 = vector.extract_strided_slice %34 {offsets = [7, 0], sizes = [1, 128], strides = [1, 1]} : vector<8x128xf32> to vector<1x128xf32>
    %289 = vector.broadcast %288 : vector<1x128xf32> to vector<16x128xf32>
    %290 = arith.mulf %45, %289 : vector<16x128xf32>
    %291 = arith.addf %287, %290 : vector<16x128xf32>
    %292 = vector.extract_strided_slice %38 {offsets = [7, 0], sizes = [1, 128], strides = [1, 1]} : vector<8x128xf32> to vector<1x128xf32>
    %293 = vector.broadcast %292 : vector<1x128xf32> to vector<16x128xf32>
    %294 = arith.mulf %48, %293 : vector<16x128xf32>
    %295 = arith.addf %291, %294 : vector<16x128xf32>
    %cst_45 = arith.constant 0.000000e+00 : f32
    %296 = vector.broadcast %cst_45 : f32 to vector<16x128xf32>
    %297 = arith.maximumf %295, %296 : vector<16x128xf32>
    %298 = arith.addf %283, %297 : vector<16x128xf32>
    %cst_46 = arith.constant dense<0.000000e+00> : vector<16xf32>
    %299 = vector.multi_reduction <add>, %298, %cst_46 [1] : vector<16x128xf32> to vector<16xf32>
    %300 = vector.shape_cast %299 : vector<16xf32> to vector<16x1xf32>
    %cst_47 = arith.constant 9.765625E-4 : f32
    %301 = vector.broadcast %cst_47 : f32 to vector<16x1xf32>
    %302 = arith.mulf %300, %301 : vector<16x1xf32>
    %c0_48 = arith.constant 0 : index
    %c1_49 = arith.constant 1 : index
    %303 = vector.load %arg8[%c0_48, %c1_49] : memref<26x2xf32, #tpu.memory_space<vmem>>, vector<16x1xf32>
    tpu.vector_store %arg8[%c0_48, %c1_49], %302 {strides = array<i32>} : memref<26x2xf32, #tpu.memory_space<vmem>>, vector<16x1xf32>,
    %c0_50 = arith.constant 0 : index
    %c0_51 = arith.constant 0 : index
    %304 = vector.load %arg8[%c0_50, %c0_51] : memref<26x2xf32, #tpu.memory_space<vmem>>, vector<16x2xf32>
    %c0_52 = arith.constant 0 : index
    %c0_53 = arith.constant 0 : index
    %305 = vector.load %arg6[%c0_52, %c0_53] : memref<10x16xf32, #tpu.memory_space<vmem>>, vector<10x16xf32>
    %cst_54 = arith.constant 0.000000e+00 : f32
    %306 = vector.broadcast %cst_54 : f32 to vector<10x2xf32>
    %307 = vector.extract_strided_slice %305 {offsets = [0, 0], sizes = [10, 1], strides = [1, 1]} : vector<10x16xf32> to vector<10x1xf32>
    %308 = vector.extract_strided_slice %304 {offsets = [0, 0], sizes = [1, 2], strides = [1, 1]} : vector<16x2xf32> to vector<1x2xf32>
    %309 = vector.broadcast %307 : vector<10x1xf32> to vector<10x2xf32>
    %310 = vector.broadcast %308 : vector<1x2xf32> to vector<10x2xf32>
    %311 = arith.mulf %309, %310 : vector<10x2xf32>
    %312 = arith.addf %306, %311 : vector<10x2xf32>
    %313 = vector.extract_strided_slice %305 {offsets = [0, 1], sizes = [10, 1], strides = [1, 1]} : vector<10x16xf32> to vector<10x1xf32>
    %314 = vector.extract_strided_slice %304 {offsets = [1, 0], sizes = [1, 2], strides = [1, 1]} : vector<16x2xf32> to vector<1x2xf32>
    %315 = vector.broadcast %313 : vector<10x1xf32> to vector<10x2xf32>
    %316 = vector.broadcast %314 : vector<1x2xf32> to vector<10x2xf32>
    %317 = arith.mulf %315, %316 : vector<10x2xf32>
    %318 = arith.addf %312, %317 : vector<10x2xf32>
    %319 = vector.extract_strided_slice %305 {offsets = [0, 2], sizes = [10, 1], strides = [1, 1]} : vector<10x16xf32> to vector<10x1xf32>
    %320 = vector.extract_strided_slice %304 {offsets = [2, 0], sizes = [1, 2], strides = [1, 1]} : vector<16x2xf32> to vector<1x2xf32>
    %321 = vector.broadcast %319 : vector<10x1xf32> to vector<10x2xf32>
    %322 = vector.broadcast %320 : vector<1x2xf32> to vector<10x2xf32>
    %323 = arith.mulf %321, %322 : vector<10x2xf32>
    %324 = arith.addf %318, %323 : vector<10x2xf32>
    %325 = vector.extract_strided_slice %305 {offsets = [0, 3], sizes = [10, 1], strides = [1, 1]} : vector<10x16xf32> to vector<10x1xf32>
    %326 = vector.extract_strided_slice %304 {offsets = [3, 0], sizes = [1, 2], strides = [1, 1]} : vector<16x2xf32> to vector<1x2xf32>
    %327 = vector.broadcast %325 : vector<10x1xf32> to vector<10x2xf32>
    %328 = vector.broadcast %326 : vector<1x2xf32> to vector<10x2xf32>
    %329 = arith.mulf %327, %328 : vector<10x2xf32>
    %330 = arith.addf %324, %329 : vector<10x2xf32>
    %331 = vector.extract_strided_slice %305 {offsets = [0, 4], sizes = [10, 1], strides = [1, 1]} : vector<10x16xf32> to vector<10x1xf32>
    %332 = vector.extract_strided_slice %304 {offsets = [4, 0], sizes = [1, 2], strides = [1, 1]} : vector<16x2xf32> to vector<1x2xf32>
    %333 = vector.broadcast %331 : vector<10x1xf32> to vector<10x2xf32>
    %334 = vector.broadcast %332 : vector<1x2xf32> to vector<10x2xf32>
    %335 = arith.mulf %333, %334 : vector<10x2xf32>
    %336 = arith.addf %330, %335 : vector<10x2xf32>
    %337 = vector.extract_strided_slice %305 {offsets = [0, 5], sizes = [10, 1], strides = [1, 1]} : vector<10x16xf32> to vector<10x1xf32>
    %338 = vector.extract_strided_slice %304 {offsets = [5, 0], sizes = [1, 2], strides = [1, 1]} : vector<16x2xf32> to vector<1x2xf32>
    %339 = vector.broadcast %337 : vector<10x1xf32> to vector<10x2xf32>
    %340 = vector.broadcast %338 : vector<1x2xf32> to vector<10x2xf32>
    %341 = arith.mulf %339, %340 : vector<10x2xf32>
    %342 = arith.addf %336, %341 : vector<10x2xf32>
    %343 = vector.extract_strided_slice %305 {offsets = [0, 6], sizes = [10, 1], strides = [1, 1]} : vector<10x16xf32> to vector<10x1xf32>
    %344 = vector.extract_strided_slice %304 {offsets = [6, 0], sizes = [1, 2], strides = [1, 1]} : vector<16x2xf32> to vector<1x2xf32>
    %345 = vector.broadcast %343 : vector<10x1xf32> to vector<10x2xf32>
    %346 = vector.broadcast %344 : vector<1x2xf32> to vector<10x2xf32>
    %347 = arith.mulf %345, %346 : vector<10x2xf32>
    %348 = arith.addf %342, %347 : vector<10x2xf32>
    %349 = vector.extract_strided_slice %305 {offsets = [0, 7], sizes = [10, 1], strides = [1, 1]} : vector<10x16xf32> to vector<10x1xf32>
    %350 = vector.extract_strided_slice %304 {offsets = [7, 0], sizes = [1, 2], strides = [1, 1]} : vector<16x2xf32> to vector<1x2xf32>
    %351 = vector.broadcast %349 : vector<10x1xf32> to vector<10x2xf32>
    %352 = vector.broadcast %350 : vector<1x2xf32> to vector<10x2xf32>
    %353 = arith.mulf %351, %352 : vector<10x2xf32>
    %354 = arith.addf %348, %353 : vector<10x2xf32>
    %355 = vector.extract_strided_slice %305 {offsets = [0, 8], sizes = [10, 1], strides = [1, 1]} : vector<10x16xf32> to vector<10x1xf32>
    %356 = vector.extract_strided_slice %304 {offsets = [8, 0], sizes = [1, 2], strides = [1, 1]} : vector<16x2xf32> to vector<1x2xf32>
    %357 = vector.broadcast %355 : vector<10x1xf32> to vector<10x2xf32>
    %358 = vector.broadcast %356 : vector<1x2xf32> to vector<10x2xf32>
    %359 = arith.mulf %357, %358 : vector<10x2xf32>
    %360 = arith.addf %354, %359 : vector<10x2xf32>
    %361 = vector.extract_strided_slice %305 {offsets = [0, 9], sizes = [10, 1], strides = [1, 1]} : vector<10x16xf32> to vector<10x1xf32>
    %362 = vector.extract_strided_slice %304 {offsets = [9, 0], sizes = [1, 2], strides = [1, 1]} : vector<16x2xf32> to vector<1x2xf32>
    %363 = vector.broadcast %361 : vector<10x1xf32> to vector<10x2xf32>
    %364 = vector.broadcast %362 : vector<1x2xf32> to vector<10x2xf32>
    %365 = arith.mulf %363, %364 : vector<10x2xf32>
    %366 = arith.addf %360, %365 : vector<10x2xf32>
    %367 = vector.extract_strided_slice %305 {offsets = [0, 10], sizes = [10, 1], strides = [1, 1]} : vector<10x16xf32> to vector<10x1xf32>
    %368 = vector.extract_strided_slice %304 {offsets = [10, 0], sizes = [1, 2], strides = [1, 1]} : vector<16x2xf32> to vector<1x2xf32>
    %369 = vector.broadcast %367 : vector<10x1xf32> to vector<10x2xf32>
    %370 = vector.broadcast %368 : vector<1x2xf32> to vector<10x2xf32>
    %371 = arith.mulf %369, %370 : vector<10x2xf32>
    %372 = arith.addf %366, %371 : vector<10x2xf32>
    %373 = vector.extract_strided_slice %305 {offsets = [0, 11], sizes = [10, 1], strides = [1, 1]} : vector<10x16xf32> to vector<10x1xf32>
    %374 = vector.extract_strided_slice %304 {offsets = [11, 0], sizes = [1, 2], strides = [1, 1]} : vector<16x2xf32> to vector<1x2xf32>
    %375 = vector.broadcast %373 : vector<10x1xf32> to vector<10x2xf32>
    %376 = vector.broadcast %374 : vector<1x2xf32> to vector<10x2xf32>
    %377 = arith.mulf %375, %376 : vector<10x2xf32>
    %378 = arith.addf %372, %377 : vector<10x2xf32>
    %379 = vector.extract_strided_slice %305 {offsets = [0, 12], sizes = [10, 1], strides = [1, 1]} : vector<10x16xf32> to vector<10x1xf32>
    %380 = vector.extract_strided_slice %304 {offsets = [12, 0], sizes = [1, 2], strides = [1, 1]} : vector<16x2xf32> to vector<1x2xf32>
    %381 = vector.broadcast %379 : vector<10x1xf32> to vector<10x2xf32>
    %382 = vector.broadcast %380 : vector<1x2xf32> to vector<10x2xf32>
    %383 = arith.mulf %381, %382 : vector<10x2xf32>
    %384 = arith.addf %378, %383 : vector<10x2xf32>
    %385 = vector.extract_strided_slice %305 {offsets = [0, 13], sizes = [10, 1], strides = [1, 1]} : vector<10x16xf32> to vector<10x1xf32>
    %386 = vector.extract_strided_slice %304 {offsets = [13, 0], sizes = [1, 2], strides = [1, 1]} : vector<16x2xf32> to vector<1x2xf32>
    %387 = vector.broadcast %385 : vector<10x1xf32> to vector<10x2xf32>
    %388 = vector.broadcast %386 : vector<1x2xf32> to vector<10x2xf32>
    %389 = arith.mulf %387, %388 : vector<10x2xf32>
    %390 = arith.addf %384, %389 : vector<10x2xf32>
    %391 = vector.extract_strided_slice %305 {offsets = [0, 14], sizes = [10, 1], strides = [1, 1]} : vector<10x16xf32> to vector<10x1xf32>
    %392 = vector.extract_strided_slice %304 {offsets = [14, 0], sizes = [1, 2], strides = [1, 1]} : vector<16x2xf32> to vector<1x2xf32>
    %393 = vector.broadcast %391 : vector<10x1xf32> to vector<10x2xf32>
    %394 = vector.broadcast %392 : vector<1x2xf32> to vector<10x2xf32>
    %395 = arith.mulf %393, %394 : vector<10x2xf32>
    %396 = arith.addf %390, %395 : vector<10x2xf32>
    %397 = vector.extract_strided_slice %305 {offsets = [0, 15], sizes = [10, 1], strides = [1, 1]} : vector<10x16xf32> to vector<10x1xf32>
    %398 = vector.extract_strided_slice %304 {offsets = [15, 0], sizes = [1, 2], strides = [1, 1]} : vector<16x2xf32> to vector<1x2xf32>
    %399 = vector.broadcast %397 : vector<10x1xf32> to vector<10x2xf32>
    %400 = vector.broadcast %398 : vector<1x2xf32> to vector<10x2xf32>
    %401 = arith.mulf %399, %400 : vector<10x2xf32>
    %402 = arith.addf %396, %401 : vector<10x2xf32>
    %c0_55 = arith.constant 0 : index
    %c0_56 = arith.constant 0 : index
    %403 = vector.load %arg7[%c0_55, %c0_56] : memref<10x1xf32, #tpu.memory_space<vmem>>, vector<10x1xf32>
    %404 = vector.broadcast %403 : vector<10x1xf32> to vector<10x2xf32>
    %405 = arith.addf %402, %404 : vector<10x2xf32>
    %c16 = arith.constant 16 : index
    %c0_57 = arith.constant 0 : index
    %406 = vector.load %arg8[%c16, %c0_57] : memref<26x2xf32, #tpu.memory_space<vmem>>, vector<10x2xf32>
    tpu.vector_store %arg8[%c16, %c0_57], %405 {strides = array<i32>} : memref<26x2xf32, #tpu.memory_space<vmem>>, vector<10x2xf32>,
    return
  }
  func.func @transform_0(%arg0: i32) -> (i32, i32, i32) {
    %c0_i32 = arith.constant 0 : i32
    %c0_i32_0 = arith.constant 0 : i32
    %c0_i32_1 = arith.constant 0 : i32
    %c0_i32_2 = arith.constant 0 : i32
    return %c0_i32, %c0_i32_0, %c0_i32_1 : i32, i32, i32
  }
  func.func @transform_1(%arg0: i32) -> (i32, i32) {
    %c0_i32 = arith.constant 0 : i32
    %c0_i32_0 = arith.constant 0 : i32
    %c0_i32_1 = arith.constant 0 : i32
    return %c0_i32, %c0_i32_0 : i32, i32
  }
  func.func @transform_2(%arg0: i32) -> (i32, i32) {
    %c0_i32 = arith.constant 0 : i32
    %c0_i32_0 = arith.constant 0 : i32
    %c0_i32_1 = arith.constant 0 : i32
    return %c0_i32, %c0_i32_0 : i32, i32
  }
  func.func @transform_3(%arg0: i32) -> (i32, i32) {
    %c0_i32 = arith.constant 0 : i32
    %c0_i32_0 = arith.constant 0 : i32
    %c0_i32_1 = arith.constant 0 : i32
    return %c0_i32, %c0_i32_0 : i32, i32
  }
  func.func @transform_4(%arg0: i32) -> (i32, i32) {
    %c0_i32 = arith.constant 0 : i32
    %c0_i32_0 = arith.constant 0 : i32
    %c0_i32_1 = arith.constant 0 : i32
    return %c0_i32, %c0_i32_0 : i32, i32
  }
  func.func @transform_5(%arg0: i32) -> (i32, i32) {
    %c0_i32 = arith.constant 0 : i32
    %c0_i32_0 = arith.constant 0 : i32
    %c0_i32_1 = arith.constant 0 : i32
    return %c0_i32, %c0_i32_0 : i32, i32
  }
  func.func @transform_6(%arg0: i32) -> (i32, i32) {
    %c0_i32 = arith.constant 0 : i32
    %c0_i32_0 = arith.constant 0 : i32
    %c0_i32_1 = arith.constant 0 : i32
    return %c0_i32, %c0_i32_0 : i32, i32
  }
  func.func @transform_7(%arg0: i32) -> (i32, i32) {
    %c0_i32 = arith.constant 0 : i32
    %c0_i32_0 = arith.constant 0 : i32
    %c0_i32_1 = arith.constant 0 : i32
    return %c0_i32, %c0_i32_0 : i32, i32
  }
}

</mosaic_0001>

<llo_original>
// kernel: mixed_forward_impl.1
$region0: #{mixed_forward_impl.1}
  #allocation0 [shape = 'u32[]', space=smem, size = 0x4, offset = 0x4, fixed_abs, tag = 'smem constant byte address 0x4 - core index']
  #allocation1 [shape = 'u32[144,128]{1,0:T(1,128)}', space=vmem, size = 0x12000, scoped, tag = 'internal scratch']
  %s0 = inlined_call_operand.vmem [shape: f32[6,8,128], index: 0, kind: input, shape index: {}]
  %s1 = inlined_call_operand.vmem [shape: f32[8,128], index: 1, kind: input, shape index: {}]
  %s2 = inlined_call_operand.vmem [shape: f32[8,128], index: 2, kind: input, shape index: {}]
  %s3 = inlined_call_operand.vmem [shape: f32[16,3], index: 3, kind: input, shape index: {}]
  %s4 = inlined_call_operand.vmem [shape: f32[16,1], index: 4, kind: input, shape index: {}]
  %s5 = inlined_call_operand.vmem [shape: f32[10,16], index: 5, kind: input, shape index: {}]
  %s6 = inlined_call_operand.vmem [shape: f32[10,1], index: 6, kind: input, shape index: {}]
  %s7 = inlined_call_operand.vmem [shape: f32[26,2], index: 7, kind: output, shape index: {}]
  %s8 = sld [smem:[#allocation0]]
  $region38: #{mixed_forward_impl.1} parent=0
    _
  %s10 = ssub.s32 1, %s8
  %s11 = scalar_select 0, %s10, %s8
  // Predicated region
  $region2: #{mixed_forward_impl.1} parent=0 // pred_check
    _
  $region3: #{mixed_forward_impl.1} parent=0 // pred_check_branch
    %13 = sbr.rel (0) target = $region5
  $region4: #{mixed_forward_impl.1} parent=0 // pred_region
    _
  $region5: #{mixed_forward_impl.1} parent=0 // pred_fallthru
    _
  // Predicated region
  $region6: #{mixed_forward_impl.1} parent=0 // pred_check
    _
  $region7: #{mixed_forward_impl.1} parent=0 // pred_check_branch
    %15 = sbr.rel (0) target = $region9
  $region8: #{mixed_forward_impl.1} parent=0 // pred_region
    _
  $region9: #{mixed_forward_impl.1} parent=0 // pred_fallthru
    _
  // Predicated region
  $region10: #{mixed_forward_impl.1} parent=0 // pred_check
    _
  $region11: #{mixed_forward_impl.1} parent=0 // pred_check_branch
    %17 = sbr.rel (0) target = $region13
  $region12: #{mixed_forward_impl.1} parent=0 // pred_region
    _
  $region13: #{mixed_forward_impl.1} parent=0 // pred_fallthru
    _
  // Predicated region
  $region14: #{mixed_forward_impl.1} parent=0 // pred_check
    _
  $region15: #{mixed_forward_impl.1} parent=0 // pred_check_branch
    %19 = sbr.rel (0) target = $region17
  $region16: #{mixed_forward_impl.1} parent=0 // pred_region
    _
  $region17: #{mixed_forward_impl.1} parent=0 // pred_fallthru
    _
  // Predicated region
  $region18: #{mixed_forward_impl.1} parent=0 // pred_check
    _
  $region19: #{mixed_forward_impl.1} parent=0 // pred_check_branch
    %21 = sbr.rel (0) target = $region21
  $region20: #{mixed_forward_impl.1} parent=0 // pred_region
    _
  $region21: #{mixed_forward_impl.1} parent=0 // pred_fallthru
    _
  // Predicated region
  $region22: #{mixed_forward_impl.1} parent=0 // pred_check
    _
  $region23: #{mixed_forward_impl.1} parent=0 // pred_check_branch
    %23 = sbr.rel (0) target = $region25
  $region24: #{mixed_forward_impl.1} parent=0 // pred_region
    _
  $region25: #{mixed_forward_impl.1} parent=0 // pred_fallthru
    _
  // Predicated region
  $region26: #{mixed_forward_impl.1} parent=0 // pred_check
    _
  $region27: #{mixed_forward_impl.1} parent=0 // pred_check_branch
    %25 = sbr.rel (0) target = $region29
  $region28: #{mixed_forward_impl.1} parent=0 // pred_region
    _
  $region29: #{mixed_forward_impl.1} parent=0 // pred_fallthru
    _
  %v26 = vld [vmem:[%s1] sm:$0xff]
  %v27 = vtanh.pop %v26
  %v28 = vadd.f32 %v27, 1.0
  %v29 = vmul.f32 %v28, 0.5
  %v30 = vld [vmem:[%s2] sm:$0xff]
  %v31 = vtanh.pop %v30
  %v32 = vadd.f32 %v31, 1.0
  %v33 = vmul.f32 %v32, 0.5
  %v34 = vsub.f32 1.0, %v29
  %v35 = vmul.f32 %v29, %v33
  %v36 = vld [vmem:[%s0] sm:$0xff]
  %v37 = vmul.f32 %v34, %v36
  %v38 = vadd.f32 %v37, %v35
  %s39 = scalar_lea.vmem %s0, 8
  %v40 = vld [vmem:[%s39] sm:$0xff]
  %v41 = vmul.f32 %v34, %v40
  %v42 = vadd.f32 %v41, %v35
  %s43 = scalar_lea.vmem %s0, 16
  %v44 = vld [vmem:[%s43] sm:$0xff]
  %v45 = vmul.f32 %v34, %v44
  %v46 = vadd.f32 %v45, %v35
  %s47 = scalar_lea.vmem %s0, 24
  %v48 = vld [vmem:[%s47] sm:$0xff]
  %v49 = vmul.f32 %v34, %v48
  %v50 = vadd.f32 %v49, %v35
  %s51 = scalar_lea.vmem %s0, 32
  %v52 = vld [vmem:[%s51] sm:$0xff]
  %v53 = vmul.f32 %v34, %v52
  %v54 = vadd.f32 %v53, %v35
  %s55 = scalar_lea.vmem %s0, 40
  %v56 = vld [vmem:[%s55] sm:$0xff]
  %v57 = vmul.f32 %v34, %v56
  %v58 = vadd.f32 %v57, %v35
  %v59 = vld [vmem:[%s3] sm:$0xff]
  %v60 = vld [vmem:[%s3 + $0x8] sm:$0xff]
  %62 = vset.pattern.permute.xlu0 0
  %63 = vperm.xlu0 %62, %v59
  %v64 = vpop.permute.xlu0 %63
  %67 = vset.pattern.permute.xlu0 0
  %68 = vperm.xlu0 %67, %v60
  %v69 = vpop.permute.xlu0 %68
  %71 = vset.pattern.permute.xlu0 1
  %72 = vperm.xlu0 %71, %v59
  %v73 = vpop.permute.xlu0 %72
  %75 = vset.pattern.permute.xlu0 1
  %76 = vperm.xlu0 %75, %v60
  %v77 = vpop.permute.xlu0 %76
  %79 = vset.pattern.permute.xlu0 2
  %80 = vperm.xlu0 %79, %v59
  %v81 = vpop.permute.xlu0 %80
  %83 = vset.pattern.permute.xlu0 2
  %84 = vperm.xlu0 %83, %v60
  %v85 = vpop.permute.xlu0 %84
  %v87 = vld [vmem:[%s4] sm:$0xff]
  %v88 = vld [vmem:[%s4 + $0x8] sm:$0xff]
  %90 = vset.pattern.permute.xlu0 0
  %91 = vperm.xlu0 %90, %v87
  %v92 = vpop.permute.xlu0 %91
  %95 = vset.pattern.permute.xlu0 0
  %96 = vperm.xlu0 %95, %v88
  %v97 = vpop.permute.xlu0 %96
  %v99 = vlaneseq
  %v100 = vshrl.u32 %v99, 7
  %v101 = vsub.s32 0, %v100
  %v102 = vrot.slane %v38, %v101
  %v103 = vmul.f32 %v64, %v102
  %v104 = vmul.f32 %v69, %v102
  %v105 = vadd.f32 %v92, %v103
  %v106 = vadd.f32 %v97, %v104
  %v107 = vlaneseq
  %v108 = vshrl.u32 %v107, 7
  %v109 = vsub.s32 0, %v108
  %v110 = vrot.slane %v42, %v109
  %v111 = vmul.f32 %v73, %v110
  %v112 = vmul.f32 %v77, %v110
  %v113 = vadd.f32 %v105, %v111
  %v114 = vadd.f32 %v106, %v112
  %v115 = vlaneseq
  %v116 = vshrl.u32 %v115, 7
  %v117 = vsub.s32 0, %v116
  %v118 = vrot.slane %v46, %v117
  %v119 = vmul.f32 %v81, %v118
  %v120 = vmul.f32 %v85, %v118
  %v121 = vadd.f32 %v113, %v119
  %v122 = vadd.f32 %v114, %v120
  %v123 = vmax.f32 %v121, 0.0
  %v124 = vmax.f32 %v122, 0.0
  %v125 = vadd.f32 %v123, 0.0
  %v126 = vadd.f32 %v124, 0.0
  %v127 = vlaneseq
  %v128 = vshrl.u32 %v127, 7
  %v129 = vsub.s32 1, %v128
  %v130 = vrot.slane %v38, %v129
  %v131 = vmul.f32 %v64, %v130
  %v132 = vmul.f32 %v69, %v130
  %v133 = vadd.f32 %v92, %v131
  %v134 = vadd.f32 %v97, %v132
  %v135 = vlaneseq
  %v136 = vshrl.u32 %v135, 7
  %v137 = vsub.s32 1, %v136
  %v138 = vrot.slane %v42, %v137
  %v139 = vmul.f32 %v73, %v138
  %v140 = vmul.f32 %v77, %v138
  %v141 = vadd.f32 %v133, %v139
  %v142 = vadd.f32 %v134, %v140
  %v143 = vlaneseq
  %v144 = vshrl.u32 %v143, 7
  %v145 = vsub.s32 1, %v144
  %v146 = vrot.slane %v46, %v145
  %v147 = vmul.f32 %v81, %v146
  %v148 = vmul.f32 %v85, %v146
  %v149 = vadd.f32 %v141, %v147
  %v150 = vadd.f32 %v142, %v148
  %v151 = vmax.f32 %v149, 0.0
  %v152 = vmax.f32 %v150, 0.0
  %v153 = vadd.f32 %v125, %v151
  %v154 = vadd.f32 %v126, %v152
  %v155 = vlaneseq
  %v156 = vshrl.u32 %v155, 7
  %v157 = vsub.s32 2, %v156
  %v158 = vrot.slane %v38, %v157
  %v159 = vmul.f32 %v64, %v158
  %v160 = vmul.f32 %v69, %v158
  %v161 = vadd.f32 %v92, %v159
  %v162 = vadd.f32 %v97, %v160
  %v163 = vlaneseq
  %v164 = vshrl.u32 %v163, 7
  %v165 = vsub.s32 2, %v164
  %v166 = vrot.slane %v42, %v165
  %v167 = vmul.f32 %v73, %v166
  %v168 = vmul.f32 %v77, %v166
  %v169 = vadd.f32 %v161, %v167
  %v170 = vadd.f32 %v162, %v168
  %v171 = vlaneseq
  %v172 = vshrl.u32 %v171, 7
  %v173 = vsub.s32 2, %v172
  %v174 = vrot.slane %v46, %v173
  %v175 = vmul.f32 %v81, %v174
  %v176 = vmul.f32 %v85, %v174
  %v177 = vadd.f32 %v169, %v175
  %v178 = vadd.f32 %v170, %v176
  %v179 = vmax.f32 %v177, 0.0
  %v180 = vmax.f32 %v178, 0.0
  %v181 = vadd.f32 %v153, %v179
  %v182 = vadd.f32 %v154, %v180
  %v183 = vlaneseq
  %v184 = vshrl.u32 %v183, 7
  %v185 = vsub.s32 3, %v184
  %v186 = vrot.slane %v38, %v185
  %v187 = vmul.f32 %v64, %v186
  %v188 = vmul.f32 %v69, %v186
  %v189 = vadd.f32 %v92, %v187
  %v190 = vadd.f32 %v97, %v188
  %v191 = vlaneseq
  %v192 = vshrl.u32 %v191, 7
  %v193 = vsub.s32 3, %v192
  %v194 = vrot.slane %v42, %v193
  %v195 = vmul.f32 %v73, %v194
  %v196 = vmul.f32 %v77, %v194
  %v197 = vadd.f32 %v189, %v195
  %v198 = vadd.f32 %v190, %v196
  %v199 = vlaneseq
  %v200 = vshrl.u32 %v199, 7
  %v201 = vsub.s32 3, %v200
  %v202 = vrot.slane %v46, %v201
  %v203 = vmul.f32 %v81, %v202
  %v204 = vmul.f32 %v85, %v202
  %v205 = vadd.f32 %v197, %v203
  %v206 = vadd.f32 %v198, %v204
  %v207 = vmax.f32 %v205, 0.0
  %v208 = vmax.f32 %v206, 0.0
  %v209 = vadd.f32 %v181, %v207
  %v210 = vadd.f32 %v182, %v208
  %v211 = vlaneseq
  %v212 = vshrl.u32 %v211, 7
  %v213 = vsub.s32 4, %v212
  %v214 = vrot.slane %v38, %v213
  %v215 = vmul.f32 %v64, %v214
  %v216 = vmul.f32 %v69, %v214
  %v217 = vadd.f32 %v92, %v215
  %v218 = vadd.f32 %v97, %v216
  %v219 = vlaneseq
  %v220 = vshrl.u32 %v219, 7
  %v221 = vsub.s32 4, %v220
  %v222 = vrot.slane %v42, %v221
  %v223 = vmul.f32 %v73, %v222
  %v224 = vmul.f32 %v77, %v222
  %v225 = vadd.f32 %v217, %v223
  %v226 = vadd.f32 %v218, %v224
  %v227 = vlaneseq
  %v228 = vshrl.u32 %v227, 7
  %v229 = vsub.s32 4, %v228
  %v230 = vrot.slane %v46, %v229
  %v231 = vmul.f32 %v81, %v230
  %v232 = vmul.f32 %v85, %v230
  %v233 = vadd.f32 %v225, %v231
  %v234 = vadd.f32 %v226, %v232
  %v235 = vmax.f32 %v233, 0.0
  %v236 = vmax.f32 %v234, 0.0
  %v237 = vadd.f32 %v209, %v235
  %v238 = vadd.f32 %v210, %v236
  %v239 = vlaneseq
  %v240 = vshrl.u32 %v239, 7
  %v241 = vsub.s32 5, %v240
  %v242 = vrot.slane %v38, %v241
  %v243 = vmul.f32 %v64, %v242
  %v244 = vmul.f32 %v69, %v242
  %v245 = vadd.f32 %v92, %v243
  %v246 = vadd.f32 %v97, %v244
  %v247 = vlaneseq
  %v248 = vshrl.u32 %v247, 7
  %v249 = vsub.s32 5, %v248
  %v250 = vrot.slane %v42, %v249
  %v251 = vmul.f32 %v73, %v250
  %v252 = vmul.f32 %v77, %v250
  %v253 = vadd.f32 %v245, %v251
  %v254 = vadd.f32 %v246, %v252
  %v255 = vlaneseq
  %v256 = vshrl.u32 %v255, 7
  %v257 = vsub.s32 5, %v256
  %v258 = vrot.slane %v46, %v257
  %v259 = vmul.f32 %v81, %v258
  %v260 = vmul.f32 %v85, %v258
  %v261 = vadd.f32 %v253, %v259
  %v262 = vadd.f32 %v254, %v260
  %v263 = vmax.f32 %v261, 0.0
  %v264 = vmax.f32 %v262, 0.0
  %v265 = vadd.f32 %v237, %v263
  %v266 = vadd.f32 %v238, %v264
  %v267 = vlaneseq
  %v268 = vshrl.u32 %v267, 7
  %v269 = vsub.s32 6, %v268
  %v270 = vrot.slane %v38, %v269
  %v271 = vmul.f32 %v64, %v270
  %v272 = vmul.f32 %v69, %v270
  %v273 = vadd.f32 %v92, %v271
  %v274 = vadd.f32 %v97, %v272
  %v275 = vlaneseq
  %v276 = vshrl.u32 %v275, 7
  %v277 = vsub.s32 6, %v276
  %v278 = vrot.slane %v42, %v277
  %v279 = vmul.f32 %v73, %v278
  %v280 = vmul.f32 %v77, %v278
  %v281 = vadd.f32 %v273, %v279
  %v282 = vadd.f32 %v274, %v280
  %v283 = vlaneseq
  %v284 = vshrl.u32 %v283, 7
  %v285 = vsub.s32 6, %v284
  %v286 = vrot.slane %v46, %v285
  %v287 = vmul.f32 %v81, %v286
  %v288 = vmul.f32 %v85, %v286
  %v289 = vadd.f32 %v281, %v287
  %v290 = vadd.f32 %v282, %v288
  %v291 = vmax.f32 %v289, 0.0
  %v292 = vmax.f32 %v290, 0.0
  %v293 = vadd.f32 %v265, %v291
  %v294 = vadd.f32 %v266, %v292
  %v295 = vlaneseq
  %v296 = vshrl.u32 %v295, 7
  %v297 = vsub.s32 7, %v296
  %v298 = vrot.slane %v38, %v297
  %v299 = vmul.f32 %v64, %v298
  %v300 = vmul.f32 %v69, %v298
  %v301 = vadd.f32 %v92, %v299
  %v302 = vadd.f32 %v97, %v300
  %v303 = vlaneseq
  %v304 = vshrl.u32 %v303, 7
  %v305 = vsub.s32 7, %v304
  %v306 = vrot.slane %v42, %v305
  %v307 = vmul.f32 %v73, %v306
  %v308 = vmul.f32 %v77, %v306
  %v309 = vadd.f32 %v301, %v307
  %v310 = vadd.f32 %v302, %v308
  %v311 = vlaneseq
  %v312 = vshrl.u32 %v311, 7
  %v313 = vsub.s32 7, %v312
  %v314 = vrot.slane %v46, %v313
  %v315 = vmul.f32 %v81, %v314
  %v316 = vmul.f32 %v85, %v314
  %v317 = vadd.f32 %v309, %v315
  %v318 = vadd.f32 %v310, %v316
  %v319 = vmax.f32 %v317, 0.0
  %v320 = vmax.f32 %v318, 0.0
  %v321 = vadd.f32 %v293, %v319
  %v322 = vadd.f32 %v294, %v320
  %323 = vadd.xlane.f32.xlu0 %v321
  %v324 = vpop.xlane.xlu0 %323
  %325 = vadd.xlane.f32.xlu0 %v322
  %v326 = vpop.xlane.xlu0 %325
  %v327 = vmul.f32 %v324, 0.0009765625
  %v328 = vmul.f32 %v326, 0.0009765625
  %vm329 = vcmask 7168
  %330 = vst.msk [vmem:[%s7] sm:$0xff] %vm329, %v327
  %331 = vst.msk [vmem:[%s7 + $0x8] sm:$0xff] %vm329, %v328
  %v332 = vlaneseq
  %v333 = vshrl.u32 %v332, 7
  %v334 = vsub.s32 0, %v333
  %v335 = vrot.slane %v50, %v334
  %v336 = vmul.f32 %v64, %v335
  %v337 = vmul.f32 %v69, %v335
  %v338 = vadd.f32 %v92, %v336
  %v339 = vadd.f32 %v97, %v337
  %v340 = vlaneseq
  %v341 = vshrl.u32 %v340, 7
  %v342 = vsub.s32 0, %v341
  %v343 = vrot.slane %v54, %v342
  %v344 = vmul.f32 %v73, %v343
  %v345 = vmul.f32 %v77, %v343
  %v346 = vadd.f32 %v338, %v344
  %v347 = vadd.f32 %v339, %v345
  %v348 = vlaneseq
  %v349 = vshrl.u32 %v348, 7
  %v350 = vsub.s32 0, %v349
  %v351 = vrot.slane %v58, %v350
  %v352 = vmul.f32 %v81, %v351
  %v353 = vmul.f32 %v85, %v351
  %v354 = vadd.f32 %v346, %v352
  %v355 = vadd.f32 %v347, %v353
  %v356 = vmax.f32 %v354, 0.0
  %v357 = vmax.f32 %v355, 0.0
  %v358 = vadd.f32 %v356, 0.0
  %v359 = vadd.f32 %v357, 0.0
  %v360 = vlaneseq
  %v361 = vshrl.u32 %v360, 7
  %v362 = vsub.s32 1, %v361
  %v363 = vrot.slane %v50, %v362
  %v364 = vmul.f32 %v64, %v363
  %v365 = vmul.f32 %v69, %v363
  %v366 = vadd.f32 %v92, %v364
  %v367 = vadd.f32 %v97, %v365
  %v368 = vlaneseq
  %v369 = vshrl.u32 %v368, 7
  %v370 = vsub.s32 1, %v369
  %v371 = vrot.slane %v54, %v370
  %v372 = vmul.f32 %v73, %v371
  %v373 = vmul.f32 %v77, %v371
  %v374 = vadd.f32 %v366, %v372
  %v375 = vadd.f32 %v367, %v373
  %v376 = vlaneseq
  %v377 = vshrl.u32 %v376, 7
  %v378 = vsub.s32 1, %v377
  %v379 = vrot.slane %v58, %v378
  %v380 = vmul.f32 %v81, %v379
  %v381 = vmul.f32 %v85, %v379
  %v382 = vadd.f32 %v374, %v380
  %v383 = vadd.f32 %v375, %v381
  %v384 = vmax.f32 %v382, 0.0
  %v385 = vmax.f32 %v383, 0.0
  %v386 = vadd.f32 %v358, %v384
  %v387 = vadd.f32 %v359, %v385
  %v388 = vlaneseq
  %v389 = vshrl.u32 %v388, 7
  %v390 = vsub.s32 2, %v389
  %v391 = vrot.slane %v50, %v390
  %v392 = vmul.f32 %v64, %v391
  %v393 = vmul.f32 %v69, %v391
  %v394 = vadd.f32 %v92, %v392
  %v395 = vadd.f32 %v97, %v393
  %v396 = vlaneseq
  %v397 = vshrl.u32 %v396, 7
  %v398 = vsub.s32 2, %v397
  %v399 = vrot.slane %v54, %v398
  %v400 = vmul.f32 %v73, %v399
  %v401 = vmul.f32 %v77, %v399
  %v402 = vadd.f32 %v394, %v400
  %v403 = vadd.f32 %v395, %v401
  %v404 = vlaneseq
  %v405 = vshrl.u32 %v404, 7
  %v406 = vsub.s32 2, %v405
  %v407 = vrot.slane %v58, %v406
  %v408 = vmul.f32 %v81, %v407
  %v409 = vmul.f32 %v85, %v407
  %v410 = vadd.f32 %v402, %v408
  %v411 = vadd.f32 %v403, %v409
  %v412 = vmax.f32 %v410, 0.0
  %v413 = vmax.f32 %v411, 0.0
  %v414 = vadd.f32 %v386, %v412
  %v415 = vadd.f32 %v387, %v413
  %v416 = vlaneseq
  %v417 = vshrl.u32 %v416, 7
  %v418 = vsub.s32 3, %v417
  %v419 = vrot.slane %v50, %v418
  %v420 = vmul.f32 %v64, %v419
  %v421 = vmul.f32 %v69, %v419
  %v422 = vadd.f32 %v92, %v420
  %v423 = vadd.f32 %v97, %v421
  %v424 = vlaneseq
  %v425 = vshrl.u32 %v424, 7
  %v426 = vsub.s32 3, %v425
  %v427 = vrot.slane %v54, %v426
  %v428 = vmul.f32 %v73, %v427
  %v429 = vmul.f32 %v77, %v427
  %v430 = vadd.f32 %v422, %v428
  %v431 = vadd.f32 %v423, %v429
  %v432 = vlaneseq
  %v433 = vshrl.u32 %v432, 7
  %v434 = vsub.s32 3, %v433
  %v435 = vrot.slane %v58, %v434
  %v436 = vmul.f32 %v81, %v435
  %v437 = vmul.f32 %v85, %v435
  %v438 = vadd.f32 %v430, %v436
  %v439 = vadd.f32 %v431, %v437
  %v440 = vmax.f32 %v438, 0.0
  %v441 = vmax.f32 %v439, 0.0
  %v442 = vadd.f32 %v414, %v440
  %v443 = vadd.f32 %v415, %v441
  %v444 = vlaneseq
  %v445 = vshrl.u32 %v444, 7
  %v446 = vsub.s32 4, %v445
  %v447 = vrot.slane %v50, %v446
  %v448 = vmul.f32 %v64, %v447
  %v449 = vmul.f32 %v69, %v447
  %v450 = vadd.f32 %v92, %v448
  %v451 = vadd.f32 %v97, %v449
  %v452 = vlaneseq
  %v453 = vshrl.u32 %v452, 7
  %v454 = vsub.s32 4, %v453
  %v455 = vrot.slane %v54, %v454
  %v456 = vmul.f32 %v73, %v455
  %v457 = vmul.f32 %v77, %v455
  %v458 = vadd.f32 %v450, %v456
  %v459 = vadd.f32 %v451, %v457
  %v460 = vlaneseq
  %v461 = vshrl.u32 %v460, 7
  %v462 = vsub.s32 4, %v461
  %v463 = vrot.slane %v58, %v462
  %v464 = vmul.f32 %v81, %v463
  %v465 = vmul.f32 %v85, %v463
  %v466 = vadd.f32 %v458, %v464
  %v467 = vadd.f32 %v459, %v465
  %v468 = vmax.f32 %v466, 0.0
  %v469 = vmax.f32 %v467, 0.0
  %v470 = vadd.f32 %v442, %v468
  %v471 = vadd.f32 %v443, %v469
  %v472 = vlaneseq
  %v473 = vshrl.u32 %v472, 7
  %v474 = vsub.s32 5, %v473
  %v475 = vrot.slane %v50, %v474
  %v476 = vmul.f32 %v64, %v475
  %v477 = vmul.f32 %v69, %v475
  %v478 = vadd.f32 %v92, %v476
  %v479 = vadd.f32 %v97, %v477
  %v480 = vlaneseq
  %v481 = vshrl.u32 %v480, 7
  %v482 = vsub.s32 5, %v481
  %v483 = vrot.slane %v54, %v482
  %v484 = vmul.f32 %v73, %v483
  %v485 = vmul.f32 %v77, %v483
  %v486 = vadd.f32 %v478, %v484
  %v487 = vadd.f32 %v479, %v485
  %v488 = vlaneseq
  %v489 = vshrl.u32 %v488, 7
  %v490 = vsub.s32 5, %v489
  %v491 = vrot.slane %v58, %v490
  %v492 = vmul.f32 %v81, %v491
  %v493 = vmul.f32 %v85, %v491
  %v494 = vadd.f32 %v486, %v492
  %v495 = vadd.f32 %v487, %v493
  %v496 = vmax.f32 %v494, 0.0
  %v497 = vmax.f32 %v495, 0.0
  %v498 = vadd.f32 %v470, %v496
  %v499 = vadd.f32 %v471, %v497
  %v500 = vlaneseq
  %v501 = vshrl.u32 %v500, 7
  %v502 = vsub.s32 6, %v501
  %v503 = vrot.slane %v50, %v502
  %v504 = vmul.f32 %v64, %v503
  %v505 = vmul.f32 %v69, %v503
  %v506 = vadd.f32 %v92, %v504
  %v507 = vadd.f32 %v97, %v505
  %v508 = vlaneseq
  %v509 = vshrl.u32 %v508, 7
  %v510 = vsub.s32 6, %v509
  %v511 = vrot.slane %v54, %v510
  %v512 = vmul.f32 %v73, %v511
  %v513 = vmul.f32 %v77, %v511
  %v514 = vadd.f32 %v506, %v512
  %v515 = vadd.f32 %v507, %v513
  %v516 = vlaneseq
  %v517 = vshrl.u32 %v516, 7
  %v518 = vsub.s32 6, %v517
  %v519 = vrot.slane %v58, %v518
  %v520 = vmul.f32 %v81, %v519
  %v521 = vmul.f32 %v85, %v519
  %v522 = vadd.f32 %v514, %v520
  %v523 = vadd.f32 %v515, %v521
  %v524 = vmax.f32 %v522, 0.0
  %v525 = vmax.f32 %v523, 0.0
  %v526 = vadd.f32 %v498, %v524
  %v527 = vadd.f32 %v499, %v525
  %v528 = vlaneseq
  %v529 = vshrl.u32 %v528, 7
  %v530 = vsub.s32 7, %v529
  %v531 = vrot.slane %v50, %v530
  %v532 = vmul.f32 %v64, %v531
  %v533 = vmul.f32 %v69, %v531
  %v534 = vadd.f32 %v92, %v532
  %v535 = vadd.f32 %v97, %v533
  %v536 = vlaneseq
  %v537 = vshrl.u32 %v536, 7
  %v538 = vsub.s32 7, %v537
  %v539 = vrot.slane %v54, %v538
  %v540 = vmul.f32 %v73, %v539
  %v541 = vmul.f32 %v77, %v539
  %v542 = vadd.f32 %v534, %v540
  %v543 = vadd.f32 %v535, %v541
  %v544 = vlaneseq
  %v545 = vshrl.u32 %v544, 7
  %v546 = vsub.s32 7, %v545
  %v547 = vrot.slane %v58, %v546
  %v548 = vmul.f32 %v81, %v547
  %v549 = vmul.f32 %v85, %v547
  %v550 = vadd.f32 %v542, %v548
  %v551 = vadd.f32 %v543, %v549
  %v552 = vmax.f32 %v550, 0.0
  %v553 = vmax.f32 %v551, 0.0
  %v554 = vadd.f32 %v526, %v552
  %v555 = vadd.f32 %v527, %v553
  %556 = vadd.xlane.f32.xlu0 %v554
  %v557 = vpop.xlane.xlu0 %556
  %558 = vadd.xlane.f32.xlu0 %v555
  %v559 = vpop.xlane.xlu0 %558
  %v560 = vmul.f32 %v557, 0.0009765625
  %v561 = vmul.f32 %v559, 0.0009765625
  %vm562 = vcmask 15368
  %563 = vst.msk [vmem:[%s7] sm:$0xff] %vm562, %v560
  %564 = vst.msk [vmem:[%s7 + $0x8] sm:$0xff] %vm562, %v561
  %v565 = vld [vmem:[%s7] sm:$0xff]
  %v566 = vld [vmem:[%s7 + $0x8] sm:$0xff]
  %v567 = vld [vmem:[%s5] sm:$0xff]
  %v568 = vld [vmem:[%s5 + $0x8] sm:$0x3]
  %570 = vset.pattern.permute.xlu0 0
  %571 = vperm.xlu0 %570, %v567
  %v572 = vpop.permute.xlu0 %571
  %575 = vset.pattern.permute.xlu0 0
  %576 = vperm.xlu0 %575, %v568
  %v577 = vpop.permute.xlu0 %576
  %v579 = vlaneseq
  %v580 = vshrl.u32 %v579, 7
  %v581 = vsub.s32 0, %v580
  %v582 = vrot.slane %v565, %v581
  %v583 = vmul.f32 %v572, %v582
  %v584 = vmul.f32 %v577, %v582
  %v585 = vadd.f32 %v583, 0.0
  %v586 = vadd.f32 %v584, 0.0
  %587 = vset.pattern.permute.xlu0 1
  %588 = vperm.xlu0 %587, %v567
  %v589 = vpop.permute.xlu0 %588
  %591 = vset.pattern.permute.xlu0 1
  %592 = vperm.xlu0 %591, %v568
  %v593 = vpop.permute.xlu0 %592
  %v595 = vlaneseq
  %v596 = vshrl.u32 %v595, 7
  %v597 = vsub.s32 1, %v596
  %v598 = vrot.slane %v565, %v597
  %v599 = vmul.f32 %v589, %v598
  %v600 = vmul.f32 %v593, %v598
  %v601 = vadd.f32 %v585, %v599
  %v602 = vadd.f32 %v586, %v600
  %603 = vset.pattern.permute.xlu0 2
  %604 = vperm.xlu0 %603, %v567
  %v605 = vpop.permute.xlu0 %604
  %607 = vset.pattern.permute.xlu0 2
  %608 = vperm.xlu0 %607, %v568
  %v609 = vpop.permute.xlu0 %608
  %v611 = vlaneseq
  %v612 = vshrl.u32 %v611, 7
  %v613 = vsub.s32 2, %v612
  %v614 = vrot.slane %v565, %v613
  %v615 = vmul.f32 %v605, %v614
  %v616 = vmul.f32 %v609, %v614
  %v617 = vadd.f32 %v601, %v615
  %v618 = vadd.f32 %v602, %v616
  %619 = vset.pattern.permute.xlu0 3
  %620 = vperm.xlu0 %619, %v567
  %v621 = vpop.permute.xlu0 %620
  %623 = vset.pattern.permute.xlu0 3
  %624 = vperm.xlu0 %623, %v568
  %v625 = vpop.permute.xlu0 %624
  %v627 = vlaneseq
  %v628 = vshrl.u32 %v627, 7
  %v629 = vsub.s32 3, %v628
  %v630 = vrot.slane %v565, %v629
  %v631 = vmul.f32 %v621, %v630
  %v632 = vmul.f32 %v625, %v630
  %v633 = vadd.f32 %v617, %v631
  %v634 = vadd.f32 %v618, %v632
  %635 = vset.pattern.permute.xlu0 4
  %636 = vperm.xlu0 %635, %v567
  %v637 = vpop.permute.xlu0 %636
  %639 = vset.pattern.permute.xlu0 4
  %640 = vperm.xlu0 %639, %v568
  %v641 = vpop.permute.xlu0 %640
  %v643 = vlaneseq
  %v644 = vshrl.u32 %v643, 7
  %v645 = vsub.s32 4, %v644
  %v646 = vrot.slane %v565, %v645
  %v647 = vmul.f32 %v637, %v646
  %v648 = vmul.f32 %v641, %v646
  %v649 = vadd.f32 %v633, %v647
  %v650 = vadd.f32 %v634, %v648
  %651 = vset.pattern.permute.xlu0 5
  %652 = vperm.xlu0 %651, %v567
  %v653 = vpop.permute.xlu0 %652
  %655 = vset.pattern.permute.xlu0 5
  %656 = vperm.xlu0 %655, %v568
  %v657 = vpop.permute.xlu0 %656
  %v659 = vlaneseq
  %v660 = vshrl.u32 %v659, 7
  %v661 = vsub.s32 5, %v660
  %v662 = vrot.slane %v565, %v661
  %v663 = vmul.f32 %v653, %v662
  %v664 = vmul.f32 %v657, %v662
  %v665 = vadd.f32 %v649, %v663
  %v666 = vadd.f32 %v650, %v664
  %667 = vset.pattern.permute.xlu0 6
  %668 = vperm.xlu0 %667, %v567
  %v669 = vpop.permute.xlu0 %668
  %671 = vset.pattern.permute.xlu0 6
  %672 = vperm.xlu0 %671, %v568
  %v673 = vpop.permute.xlu0 %672
  %v675 = vlaneseq
  %v676 = vshrl.u32 %v675, 7
  %v677 = vsub.s32 6, %v676
  %v678 = vrot.slane %v565, %v677
  %v679 = vmul.f32 %v669, %v678
  %v680 = vmul.f32 %v673, %v678
  %v681 = vadd.f32 %v665, %v679
  %v682 = vadd.f32 %v666, %v680
  %683 = vset.pattern.permute.xlu0 7
  %684 = vperm.xlu0 %683, %v567
  %v685 = vpop.permute.xlu0 %684
  %687 = vset.pattern.permute.xlu0 7
  %688 = vperm.xlu0 %687, %v568
  %v689 = vpop.permute.xlu0 %688
  %v691 = vlaneseq
  %v692 = vshrl.u32 %v691, 7
  %v693 = vsub.s32 7, %v692
  %v694 = vrot.slane %v565, %v693
  %v695 = vmul.f32 %v685, %v694
  %v696 = vmul.f32 %v689, %v694
  %v697 = vadd.f32 %v681, %v695
  %v698 = vadd.f32 %v682, %v696
  %699 = vset.pattern.permute.xlu0 8
  %700 = vperm.xlu0 %699, %v567
  %v701 = vpop.permute.xlu0 %700
  %703 = vset.pattern.permute.xlu0 8
  %704 = vperm.xlu0 %703, %v568
  %v705 = vpop.permute.xlu0 %704
  %v707 = vlaneseq
  %v708 = vshrl.u32 %v707, 7
  %v709 = vsub.s32 0, %v708
  %v710 = vrot.slane %v566, %v709
  %v711 = vmul.f32 %v701, %v710
  %v712 = vmul.f32 %v705, %v710
  %v713 = vadd.f32 %v697, %v711
  %v714 = vadd.f32 %v698, %v712
  %715 = vset.pattern.permute.xlu0 9
  %716 = vperm.xlu0 %715, %v567
  %v717 = vpop.permute.xlu0 %716
  %719 = vset.pattern.permute.xlu0 9
  %720 = vperm.xlu0 %719, %v568
  %v721 = vpop.permute.xlu0 %720
  %v723 = vlaneseq
  %v724 = vshrl.u32 %v723, 7
  %v725 = vsub.s32 1, %v724
  %v726 = vrot.slane %v566, %v725
  %v727 = vmul.f32 %v717, %v726
  %v728 = vmul.f32 %v721, %v726
  %v729 = vadd.f32 %v713, %v727
  %v730 = vadd.f32 %v714, %v728
  %731 = vset.pattern.permute.xlu0 10
  %732 = vperm.xlu0 %731, %v567
  %v733 = vpop.permute.xlu0 %732
  %735 = vset.pattern.permute.xlu0 10
  %736 = vperm.xlu0 %735, %v568
  %v737 = vpop.permute.xlu0 %736
  %v739 = vlaneseq
  %v740 = vshrl.u32 %v739, 7
  %v741 = vsub.s32 2, %v740
  %v742 = vrot.slane %v566, %v741
  %v743 = vmul.f32 %v733, %v742
  %v744 = vmul.f32 %v737, %v742
  %v745 = vadd.f32 %v729, %v743
  %v746 = vadd.f32 %v730, %v744
  %747 = vset.pattern.permute.xlu0 11
  %748 = vperm.xlu0 %747, %v567
  %v749 = vpop.permute.xlu0 %748
  %751 = vset.pattern.permute.xlu0 11
  %752 = vperm.xlu0 %751, %v568
  %v753 = vpop.permute.xlu0 %752
  %v755 = vlaneseq
  %v756 = vshrl.u32 %v755, 7
  %v757 = vsub.s32 3, %v756
  %v758 = vrot.slane %v566, %v757
  %v759 = vmul.f32 %v749, %v758
  %v760 = vmul.f32 %v753, %v758
  %v761 = vadd.f32 %v745, %v759
  %v762 = vadd.f32 %v746, %v760
  %763 = vset.pattern.permute.xlu0 12
  %764 = vperm.xlu0 %763, %v567
  %v765 = vpop.permute.xlu0 %764
  %767 = vset.pattern.permute.xlu0 12
  %768 = vperm.xlu0 %767, %v568
  %v769 = vpop.permute.xlu0 %768
  %v771 = vlaneseq
  %v772 = vshrl.u32 %v771, 7
  %v773 = vsub.s32 4, %v772
  %v774 = vrot.slane %v566, %v773
  %v775 = vmul.f32 %v765, %v774
  %v776 = vmul.f32 %v769, %v774
  %v777 = vadd.f32 %v761, %v775
  %v778 = vadd.f32 %v762, %v776
  %779 = vset.pattern.permute.xlu0 13
  %780 = vperm.xlu0 %779, %v567
  %v781 = vpop.permute.xlu0 %780
  %783 = vset.pattern.permute.xlu0 13
  %784 = vperm.xlu0 %783, %v568
  %v785 = vpop.permute.xlu0 %784
  %v787 = vlaneseq
  %v788 = vshrl.u32 %v787, 7
  %v789 = vsub.s32 5, %v788
  %v790 = vrot.slane %v566, %v789
  %v791 = vmul.f32 %v781, %v790
  %v792 = vmul.f32 %v785, %v790
  %v793 = vadd.f32 %v777, %v791
  %v794 = vadd.f32 %v778, %v792
  %795 = vset.pattern.permute.xlu0 14
  %796 = vperm.xlu0 %795, %v567
  %v797 = vpop.permute.xlu0 %796
  %799 = vset.pattern.permute.xlu0 14
  %800 = vperm.xlu0 %799, %v568
  %v801 = vpop.permute.xlu0 %800
  %v803 = vlaneseq
  %v804 = vshrl.u32 %v803, 7
  %v805 = vsub.s32 6, %v804
  %v806 = vrot.slane %v566, %v805
  %v807 = vmul.f32 %v797, %v806
  %v808 = vmul.f32 %v801, %v806
  %v809 = vadd.f32 %v793, %v807
  %v810 = vadd.f32 %v794, %v808
  %811 = vset.pattern.permute.xlu0 15
  %812 = vperm.xlu0 %811, %v567
  %v813 = vpop.permute.xlu0 %812
  %815 = vset.pattern.permute.xlu0 15
  %816 = vperm.xlu0 %815, %v568
  %v817 = vpop.permute.xlu0 %816
  %v819 = vlaneseq
  %v820 = vshrl.u32 %v819, 7
  %v821 = vsub.s32 7, %v820
  %v822 = vrot.slane %v566, %v821
  %v823 = vmul.f32 %v813, %v822
  %v824 = vmul.f32 %v817, %v822
  %v825 = vadd.f32 %v809, %v823
  %v826 = vadd.f32 %v810, %v824
  %v827 = vld [vmem:[%s6] sm:$0xff]
  %v828 = vld [vmem:[%s6 + $0x8] sm:$0x3]
  %830 = vset.pattern.permute.xlu0 0
  %831 = vperm.xlu0 %830, %v827
  %v832 = vpop.permute.xlu0 %831
  %835 = vset.pattern.permute.xlu0 0
  %836 = vperm.xlu0 %835, %v828
  %v837 = vpop.permute.xlu0 %836
  %v839 = vadd.f32 %v825, %v832
  %v840 = vadd.f32 %v826, %v837
  %vm841 = vcmask 15360
  %842 = vst.msk [vmem:[%s7 + $0x10] sm:$0xff] %vm841, %v839
  %vm843 = vcmask 9216
  %844 = vst.msk [vmem:[%s7 + $0x18] sm:$0x3] %vm843, %v840
  // Predicated region
  $region30: #{mixed_forward_impl.1} parent=0 // pred_check
    _
  $region31: #{mixed_forward_impl.1} parent=0 // pred_check_branch
    %846 = sbr.rel (0) target = $region33
  $region32: #{mixed_forward_impl.1} parent=0 // pred_region
    _
  $region33: #{mixed_forward_impl.1} parent=0 // pred_fallthru
    _
  // Predicated region
  $region34: #{mixed_forward_impl.1} parent=0 // pred_check
    _
  $region35: #{mixed_forward_impl.1} parent=0 // pred_check_branch
    %848 = sbr.rel (0) target = $region37
  $region36: #{mixed_forward_impl.1} parent=0 // pred_region
    _
  $region37: #{mixed_forward_impl.1} parent=0 // pred_fallthru
    _

</llo_original>
